<compile_context>
chip_gen: v5e
topology: v5e:2x2
jax: 0.10.0
libtpu: 0.0.40
codegen_flags: <defaults>
</compile_context>

<pallas_src>
import functools

import jax
import jax.numpy as jnp
from jax.experimental import pallas as pl
from jax.experimental.pallas import tpu as pltpu


def lstm_tag_kernel(embeds_ref, w_ih_ref, w_hh_ref, b_ref,
                    w_out_ref, b_out_ref, out_ref,
                    *, num_layers, seq_len, batch, hidden_dim):
    """One batch-group's LSTM + head, fully VMEM-resident.

    embeds_ref : (T*Bg, E)   bf16, time-major flattened embedded sequence
    w_ih_ref   : (L, E, 4H)  bf16, input weights, gate columns packed (i,f,o,g)
    w_hh_ref   : (L, H, 4H)  bf16, hidden weights, same packing
    b_ref      : (L, 1, 4H)  f32,  bias_ih + bias_hh, same packing
    w_out_ref  : (2H, tags)  bf16
    b_out_ref  : (1, tags)   f32
    out_ref    : (Bg, tags)  f32 log-probabilities
    """
    H, T, B = hidden_dim, seq_len, batch

    x_seq = embeds_ref[...]                               # (T*B, E) bf16
    h = jnp.zeros((B, H), jnp.float32)
    c = jnp.zeros((B, H), jnp.float32)

    for layer in range(num_layers):                       # static unroll (L small)
        w_ih = w_ih_ref[layer]                            # (E_in, 4H) bf16
        w_hh = w_hh_ref[layer]                            # (H, 4H)   bf16
        b = b_ref[layer]                                  # (1, 4H)   f32

        # Hoisted input projection + bias: one big bf16 matmul per layer
        # (off the critical path), f32 accumulation.
        x_proj = jnp.dot(x_seq, w_ih,
                         preferred_element_type=jnp.float32) + b   # (T*B, 4H) f32

        h = jnp.zeros((B, H), jnp.float32)
        c = jnp.zeros((B, H), jnp.float32)
        hs = []                                           # layer outputs in registers

        for t in range(T):                                # static unroll (T <= ~16)
            # One MXU push per timestep, bf16 operands, f32 accumulate.
            gates = x_proj[t * B:(t + 1) * B, :] + jnp.dot(
                h.astype(jnp.bfloat16), w_hh,
                preferred_element_type=jnp.float32)       # (B, 4H) f32
            # Packed gate order (i, f, o, g): one sigmoid, one tanh (2 EUP pushes).
            sig = jax.nn.sigmoid(gates[:, :3 * H])
            g_g = jnp.tanh(gates[:, 3 * H:])
            i_g = sig[:, :H]
            f_g = sig[:, H:2 * H]
            o_g = sig[:, 2 * H:3 * H]
            c = f_g * c + i_g * g_g
            h = o_g * jnp.tanh(c)
            hs.append(h)

        if layer < num_layers - 1:
            # Next layer's input: one concat per layer instead of T masked
            # VMEM stores + a full reload.
            x_seq = jnp.concatenate(hs, axis=0).astype(jnp.bfloat16)  # (T*B, H)

    # torch.cat((h_n, c_n), dim=2)[-1]  ==  concat of last layer's (h, c)
    hc = jnp.concatenate([h, c], axis=1)                  # (B, 2H) f32
    logits = jnp.dot(hc.astype(jnp.bfloat16), w_out_ref[...],
                     preferred_element_type=jnp.float32) + b_out_ref[...]

    # LogSoftmax over dim=1
    m = jnp.max(logits, axis=1, keepdims=True)
    z = logits - m
    lse = jnp.log(jnp.sum(jnp.exp(z), axis=1, keepdims=True))
    out_ref[...] = (z - lse).astype(out_ref.dtype)


def lstm_model_forward(sentence, packed, *, num_layers, hidden_dim,
                       num_groups=2):
    """Mirrors LSTMModel.forward for a (batch, seq_len) int32 `sentence`."""
    if sentence.ndim == 1:
        sentence = sentence.reshape(1, -1)
    # permute(1,0) + embedding lookup (glue, outside the kernel), bf16 for MXU.
    embeds = packed["embedding"][sentence.T].astype(jnp.bfloat16)  # (T, B, E)
    T, B, E = embeds.shape
    H = hidden_dim
    L = num_layers
    tagset = packed["b_out"].shape[-1]

    # Split the batch into groups sharded across TensorCores (v7x megacore);
    # each group keeps Bg rows so the sublanes stay full.
    G = num_groups if (B % num_groups == 0 and B >= num_groups) else 1
    Bg = B // G
    # Group-major, time-major-within-group flattening: (G, T*Bg, E).
    embeds_g = (embeds.reshape(T, G, Bg, E)
                .transpose(1, 0, 2, 3)
                .reshape(G, T * Bg, E))

    kernel = functools.partial(
        lstm_tag_kernel,
        num_layers=num_layers, seq_len=T, batch=Bg, hidden_dim=hidden_dim)

    in_specs = [
        pl.BlockSpec((None, T * Bg, E), lambda g: (g, 0, 0)),   # per-group embeds
        pl.BlockSpec((L, E, 4 * H), lambda g: (0, 0, 0)),       # w_ih (shared)
        pl.BlockSpec((L, H, 4 * H), lambda g: (0, 0, 0)),       # w_hh (shared)
        pl.BlockSpec((L, 1, 4 * H), lambda g: (0, 0, 0)),       # bias (shared)
        pl.BlockSpec((2 * H, tagset), lambda g: (0, 0)),        # w_out (shared)
        pl.BlockSpec((1, tagset), lambda g: (0, 0)),            # b_out (shared)
    ]
    out_specs = pl.BlockSpec((Bg, tagset), lambda g: (g, 0))

    return pl.pallas_call(
        kernel,
        out_shape=jax.ShapeDtypeStruct((B, tagset), jnp.float32),
        grid=(G,),
        in_specs=in_specs,
        out_specs=out_specs,
        compiler_params=pltpu.CompilerParams(
            dimension_semantics=("parallel",),
            vmem_limit_bytes=32 * 1024 * 1024),
    )(embeds_g, packed["w_ih"], packed["w_hh"], packed["b"],
      packed["w_out"], packed["b_out"])


def init_params(key, *, vocab_size, emb_dim, hidden_dim, num_layers, tagset):
    """PyTorch-layout parameters (gate row order i, f, g, o), all f32."""
    H = hidden_dim
    n_keys = 1 + 4 * num_layers + 2
    ks = jax.random.split(key, n_keys)
    bound = 1.0 / jnp.sqrt(H)
    params = {
        "embedding": jax.random.normal(ks[0], (vocab_size, emb_dim),
                                       jnp.float32),
    }
    idx = 1
    for l in range(num_layers):
        in_dim = emb_dim if l == 0 else H
        params[f"weight_ih_l{l}"] = jax.random.uniform(
            ks[idx], (4 * H, in_dim), jnp.float32, -bound, bound); idx += 1
        params[f"weight_hh_l{l}"] = jax.random.uniform(
            ks[idx], (4 * H, H), jnp.float32, -bound, bound); idx += 1
        params[f"bias_ih_l{l}"] = jax.random.uniform(
            ks[idx], (4 * H,), jnp.float32, -bound, bound); idx += 1
        params[f"bias_hh_l{l}"] = jax.random.uniform(
            ks[idx], (4 * H,), jnp.float32, -bound, bound); idx += 1
    params["hidden2tag_w"] = jax.random.uniform(
        ks[idx], (tagset, 2 * H), jnp.float32, -bound, bound); idx += 1
    params["hidden2tag_b"] = jax.random.uniform(
        ks[idx], (tagset,), jnp.float32, -bound, bound)
    return params


def pack_params(params, *, num_layers, hidden_dim, emb_dim):
    """Repack PyTorch-layout weights for the kernel.

    - transpose to (in_dim, 4H) / (H, 4H)
    - permute gate blocks (i, f, g, o) -> (i, f, o, g)
    - sum bias_ih + bias_hh (kept f32)
    - matmul weights cast to bf16 (MXU-native); stack per-layer
      (requires emb_dim == hidden_dim)
    """
    assert emb_dim == hidden_dim, "stacked layer weights require E == H"
    H = hidden_dim

    def repack_w(w):                                 # (4H, X) -> (X, 4H)
        i, f, g, o = w[:H], w[H:2 * H], w[2 * H:3 * H], w[3 * H:]
        return jnp.concatenate([i, f, o, g], axis=0).T

    def repack_b(b):                                 # (4H,) -> (4H,)
        i, f, g, o = b[:H], b[H:2 * H], b[2 * H:3 * H], b[3 * H:]
        return jnp.concatenate([i, f, o, g], axis=0)

    w_ih = jnp.stack([repack_w(params[f"weight_ih_l{l}"])
                      for l in range(num_layers)]).astype(jnp.bfloat16)
    w_hh = jnp.stack([repack_w(params[f"weight_hh_l{l}"])
                      for l in range(num_layers)]).astype(jnp.bfloat16)
    b = jnp.stack([(repack_b(params[f"bias_ih_l{l}"])
                    + repack_b(params[f"bias_hh_l{l}"]))[None, :]
                   for l in range(num_layers)])
    return {
        "embedding": params["embedding"],                          # f32
        "w_ih": w_ih,                                              # (L, E, 4H) bf16
        "w_hh": w_hh,                                              # (L, H, 4H) bf16
        "b": b,                                                    # (L, 1, 4H) f32
        "w_out": params["hidden2tag_w"].T.astype(jnp.bfloat16),    # (2H, tags) bf16
        "b_out": params["hidden2tag_b"][None, :],                  # (1, tags)  f32
    }


def reference_forward(sentence, params, *, num_layers, hidden_dim):
    """Pure-JAX f32 reference with PyTorch semantics and (i, f, g, o) weights."""
    H = hidden_dim
    if sentence.ndim == 1:
        sentence = sentence.reshape(1, -1)
    x_seq = params["embedding"][sentence.T]          # (T, B, E)
    T, B, _ = x_seq.shape
    h = c = jnp.zeros((B, H), jnp.float32)
    for l in range(num_layers):
        w_ih = params[f"weight_ih_l{l}"]             # (4H, in_dim)
        w_hh = params[f"weight_hh_l{l}"]             # (4H, H)
        b = params[f"bias_ih_l{l}"] + params[f"bias_hh_l{l}"]
        h = jnp.zeros((B, H), jnp.float32)
        c = jnp.zeros((B, H), jnp.float32)
        hs = []
        for t in range(T):
            g = x_seq[t] @ w_ih.T + h @ w_hh.T + b
            i_g = jax.nn.sigmoid(g[:, :H])
            f_g = jax.nn.sigmoid(g[:, H:2 * H])
            g_g = jnp.tanh(g[:, 2 * H:3 * H])
            o_g = jax.nn.sigmoid(g[:, 3 * H:])
            c = f_g * c + i_g * g_g
            h = o_g * jnp.tanh(c)
            hs.append(h)
        x_seq = jnp.stack(hs, axis=0)
    hc = jnp.concatenate([h, c], axis=1)
    logits = hc @ params["hidden2tag_w"].T + params["hidden2tag_b"]
    return jax.nn.log_softmax(logits, axis=1)


if __name__ == "__main__":
    # Small, module-consistent config.  Total batch 16 = 2 TC groups x 8 rows
    # (each group fills the 8 sublanes per vreg; 2 groups feed both v7x TCs).
    VOCAB, EMB, HID, LAYERS, TAGS = 50, 32, 32, 2, 8
    BATCH, SEQ = 16, 8

    key = jax.random.PRNGKey(0)
    k_param, k_sent = jax.random.split(key)
    params = init_params(k_param, vocab_size=VOCAB, emb_dim=EMB,
                         hidden_dim=HID, num_layers=LAYERS, tagset=TAGS)
    packed = pack_params(params, num_layers=LAYERS, hidden_dim=HID,
                         emb_dim=EMB)
    sentence = jax.random.randint(k_sent, (BATCH, SEQ), 0, VOCAB, jnp.int32)

    out = lstm_model_forward(sentence, packed,
                             num_layers=LAYERS, hidden_dim=HID, num_groups=2)
    out = jax.block_until_ready(out)

    ref = reference_forward(sentence, params,
                            num_layers=LAYERS, hidden_dim=HID)
    assert out.shape == (BATCH, TAGS)
    assert bool(jnp.all(jnp.isfinite(out)))
    # bf16 MXU operands (f32 accumulation / gate math) vs. an f32 reference:
    # tolerance loosened accordingly.
    assert bool(jnp.allclose(out, ref, atol=5e-2, rtol=5e-2))

    print("KERNEL_OK")
</pallas_src>

<mosaic_0001>
module attributes {stable_mosaic.version = 11 : i64} {
  func.func @lstm_tag_kernel(%arg0: i32, %arg1: memref<1x64x32xbf16, #tpu.memory_space<vmem>>, %arg2: memref<2x32x128xbf16, #tpu.memory_space<vmem>>, %arg3: memref<2x32x128xbf16, #tpu.memory_space<vmem>>, %arg4: memref<2x1x128xf32, #tpu.memory_space<vmem>>, %arg5: memref<64x8xbf16, #tpu.memory_space<vmem>>, %arg6: memref<1x8xf32, #tpu.memory_space<vmem>>, %arg7: memref<8x8xf32, #tpu.memory_space<vmem>>) attributes {dimension_semantics = [#tpu.dimension_semantics<parallel>], iteration_bounds = array<i64: 2>, scalar_prefetch = 0 : i64, scratch_operands = 0 : i64, tpu.core_type = #tpu.core_type<tc>, window_params = [{transform_indices = @transform_0, window_bounds = array<i64: 1, 64, 32>}, {pipeline_mode = #tpu.pipeline_mode<synchronous>, transform_indices = @transform_1, window_bounds = array<i64: 2, 32, 128>}, {pipeline_mode = #tpu.pipeline_mode<synchronous>, transform_indices = @transform_2, window_bounds = array<i64: 2, 32, 128>}, {pipeline_mode = #tpu.pipeline_mode<synchronous>, transform_indices = @transform_3, window_bounds = array<i64: 2, 1, 128>}, {pipeline_mode = #tpu.pipeline_mode<synchronous>, transform_indices = @transform_4, window_bounds = array<i64: 64, 8>}, {pipeline_mode = #tpu.pipeline_mode<synchronous>, transform_indices = @transform_5, window_bounds = array<i64: 1, 8>}, {transform_indices = @transform_6, window_bounds = array<i64: 8, 8>}]} {
    %c0 = arith.constant 0 : index
    %c0_0 = arith.constant 0 : index
    %c0_1 = arith.constant 0 : index
    %0 = vector.load %arg1[%c0, %c0_0, %c0_1] : memref<1x64x32xbf16, #tpu.memory_space<vmem>>, vector<1x64x32xbf16>
    %1 = vector.shape_cast %0 : vector<1x64x32xbf16> to vector<64x32xbf16>
    %c0_2 = arith.constant 0 : index
    %c0_3 = arith.constant 0 : index
    %c0_4 = arith.constant 0 : index
    %2 = vector.load %arg2[%c0_2, %c0_3, %c0_4] : memref<2x32x128xbf16, #tpu.memory_space<vmem>>, vector<1x32x128xbf16>
    %3 = vector.shape_cast %2 : vector<1x32x128xbf16> to vector<32x128xbf16>
    %c0_5 = arith.constant 0 : index
    %c0_6 = arith.constant 0 : index
    %c0_7 = arith.constant 0 : index
    %4 = vector.load %arg3[%c0_5, %c0_6, %c0_7] : memref<2x32x128xbf16, #tpu.memory_space<vmem>>, vector<1x32x128xbf16>
    %5 = vector.shape_cast %4 : vector<1x32x128xbf16> to vector<32x128xbf16>
    %c0_8 = arith.constant 0 : index
    %c0_9 = arith.constant 0 : index
    %c0_10 = arith.constant 0 : index
    %6 = vector.load %arg4[%c0_8, %c0_9, %c0_10] : memref<2x1x128xf32, #tpu.memory_space<vmem>>, vector<1x1x128xf32>
    %7 = vector.shape_cast %6 : vector<1x1x128xf32> to vector<1x128xf32>
    %cst = arith.constant dense<0.000000e+00> : vector<64x128xf32>
    %8 = tpu.matmul %1, %3, %cst {dimension_numbers = #tpu.dot_dimension_numbers<[1], [0], [0], [1], [0, 0, 1, 1], [], []>} : vector<64x32xbf16>, vector<32x128xbf16>, vector<64x128xf32> -> vector<64x128xf32>
    %9 = vector.broadcast %7 : vector<1x128xf32> to vector<64x128xf32>
    %10 = arith.addf %8, %9 : vector<64x128xf32>
    %cst_11 = arith.constant 0.000000e+00 : f32
    %11 = vector.broadcast %cst_11 : f32 to vector<8x32xf32>
    %cst_12 = arith.constant 0.000000e+00 : f32
    %12 = vector.broadcast %cst_12 : f32 to vector<8x32xf32>
    %13 = vector.extract_strided_slice %10 {offsets = [0, 0], sizes = [8, 128], strides = [1, 1]} : vector<64x128xf32> to vector<8x128xf32>
    %14 = arith.truncf %11 : vector<8x32xf32> to vector<8x32xbf16>
    %cst_13 = arith.constant dense<0.000000e+00> : vector<8x128xf32>
    %15 = tpu.matmul %14, %5, %cst_13 {dimension_numbers = #tpu.dot_dimension_numbers<[1], [0], [0], [1], [0, 0, 1, 1], [], []>} : vector<8x32xbf16>, vector<32x128xbf16>, vector<8x128xf32> -> vector<8x128xf32>
    %16 = arith.addf %13, %15 : vector<8x128xf32>
    %17 = vector.extract_strided_slice %16 {offsets = [0, 0], sizes = [8, 96], strides = [1, 1]} : vector<8x128xf32> to vector<8x96xf32>
    %18 = arith.negf %17 : vector<8x96xf32>
    %19 = math.exp %18 : vector<8x96xf32>
    %cst_14 = arith.constant 1.000000e+00 : f32
    %20 = vector.broadcast %cst_14 : f32 to vector<8x96xf32>
    %21 = arith.addf %20, %19 : vector<8x96xf32>
    %22 = arith.divf %20, %21 : vector<8x96xf32>
    %23 = vector.extract_strided_slice %16 {offsets = [0, 96], sizes = [8, 32], strides = [1, 1]} : vector<8x128xf32> to vector<8x32xf32>
    %24 = math.tanh %23 : vector<8x32xf32>
    %25 = vector.extract_strided_slice %22 {offsets = [0, 0], sizes = [8, 32], strides = [1, 1]} : vector<8x96xf32> to vector<8x32xf32>
    %26 = vector.extract_strided_slice %22 {offsets = [0, 32], sizes = [8, 32], strides = [1, 1]} : vector<8x96xf32> to vector<8x32xf32>
    %27 = vector.extract_strided_slice %22 {offsets = [0, 64], sizes = [8, 32], strides = [1, 1]} : vector<8x96xf32> to vector<8x32xf32>
    %28 = arith.mulf %26, %12 : vector<8x32xf32>
    %29 = arith.mulf %25, %24 : vector<8x32xf32>
    %30 = arith.addf %28, %29 : vector<8x32xf32>
    %31 = math.tanh %30 : vector<8x32xf32>
    %32 = arith.mulf %27, %31 : vector<8x32xf32>
    %33 = vector.extract_strided_slice %10 {offsets = [8, 0], sizes = [8, 128], strides = [1, 1]} : vector<64x128xf32> to vector<8x128xf32>
    %34 = arith.truncf %32 : vector<8x32xf32> to vector<8x32xbf16>
    %cst_15 = arith.constant dense<0.000000e+00> : vector<8x128xf32>
    %35 = tpu.matmul %34, %5, %cst_15 {dimension_numbers = #tpu.dot_dimension_numbers<[1], [0], [0], [1], [0, 0, 1, 1], [], []>} : vector<8x32xbf16>, vector<32x128xbf16>, vector<8x128xf32> -> vector<8x128xf32>
    %36 = arith.addf %33, %35 : vector<8x128xf32>
    %37 = vector.extract_strided_slice %36 {offsets = [0, 0], sizes = [8, 96], strides = [1, 1]} : vector<8x128xf32> to vector<8x96xf32>
    %38 = arith.negf %37 : vector<8x96xf32>
    %39 = math.exp %38 : vector<8x96xf32>
    %cst_16 = arith.constant 1.000000e+00 : f32
    %40 = vector.broadcast %cst_16 : f32 to vector<8x96xf32>
    %41 = arith.addf %40, %39 : vector<8x96xf32>
    %42 = arith.divf %40, %41 : vector<8x96xf32>
    %43 = vector.extract_strided_slice %36 {offsets = [0, 96], sizes = [8, 32], strides = [1, 1]} : vector<8x128xf32> to vector<8x32xf32>
    %44 = math.tanh %43 : vector<8x32xf32>
    %45 = vector.extract_strided_slice %42 {offsets = [0, 0], sizes = [8, 32], strides = [1, 1]} : vector<8x96xf32> to vector<8x32xf32>
    %46 = vector.extract_strided_slice %42 {offsets = [0, 32], sizes = [8, 32], strides = [1, 1]} : vector<8x96xf32> to vector<8x32xf32>
    %47 = vector.extract_strided_slice %42 {offsets = [0, 64], sizes = [8, 32], strides = [1, 1]} : vector<8x96xf32> to vector<8x32xf32>
    %48 = arith.mulf %46, %30 : vector<8x32xf32>
    %49 = arith.mulf %45, %44 : vector<8x32xf32>
    %50 = arith.addf %48, %49 : vector<8x32xf32>
    %51 = math.tanh %50 : vector<8x32xf32>
    %52 = arith.mulf %47, %51 : vector<8x32xf32>
    %53 = vector.extract_strided_slice %10 {offsets = [16, 0], sizes = [8, 128], strides = [1, 1]} : vector<64x128xf32> to vector<8x128xf32>
    %54 = arith.truncf %52 : vector<8x32xf32> to vector<8x32xbf16>
    %cst_17 = arith.constant dense<0.000000e+00> : vector<8x128xf32>
    %55 = tpu.matmul %54, %5, %cst_17 {dimension_numbers = #tpu.dot_dimension_numbers<[1], [0], [0], [1], [0, 0, 1, 1], [], []>} : vector<8x32xbf16>, vector<32x128xbf16>, vector<8x128xf32> -> vector<8x128xf32>
    %56 = arith.addf %53, %55 : vector<8x128xf32>
    %57 = vector.extract_strided_slice %56 {offsets = [0, 0], sizes = [8, 96], strides = [1, 1]} : vector<8x128xf32> to vector<8x96xf32>
    %58 = arith.negf %57 : vector<8x96xf32>
    %59 = math.exp %58 : vector<8x96xf32>
    %cst_18 = arith.constant 1.000000e+00 : f32
    %60 = vector.broadcast %cst_18 : f32 to vector<8x96xf32>
    %61 = arith.addf %60, %59 : vector<8x96xf32>
    %62 = arith.divf %60, %61 : vector<8x96xf32>
    %63 = vector.extract_strided_slice %56 {offsets = [0, 96], sizes = [8, 32], strides = [1, 1]} : vector<8x128xf32> to vector<8x32xf32>
    %64 = math.tanh %63 : vector<8x32xf32>
    %65 = vector.extract_strided_slice %62 {offsets = [0, 0], sizes = [8, 32], strides = [1, 1]} : vector<8x96xf32> to vector<8x32xf32>
    %66 = vector.extract_strided_slice %62 {offsets = [0, 32], sizes = [8, 32], strides = [1, 1]} : vector<8x96xf32> to vector<8x32xf32>
    %67 = vector.extract_strided_slice %62 {offsets = [0, 64], sizes = [8, 32], strides = [1, 1]} : vector<8x96xf32> to vector<8x32xf32>
    %68 = arith.mulf %66, %50 : vector<8x32xf32>
    %69 = arith.mulf %65, %64 : vector<8x32xf32>
    %70 = arith.addf %68, %69 : vector<8x32xf32>
    %71 = math.tanh %70 : vector<8x32xf32>
    %72 = arith.mulf %67, %71 : vector<8x32xf32>
    %73 = vector.extract_strided_slice %10 {offsets = [24, 0], sizes = [8, 128], strides = [1, 1]} : vector<64x128xf32> to vector<8x128xf32>
    %74 = arith.truncf %72 : vector<8x32xf32> to vector<8x32xbf16>
    %cst_19 = arith.constant dense<0.000000e+00> : vector<8x128xf32>
    %75 = tpu.matmul %74, %5, %cst_19 {dimension_numbers = #tpu.dot_dimension_numbers<[1], [0], [0], [1], [0, 0, 1, 1], [], []>} : vector<8x32xbf16>, vector<32x128xbf16>, vector<8x128xf32> -> vector<8x128xf32>
    %76 = arith.addf %73, %75 : vector<8x128xf32>
    %77 = vector.extract_strided_slice %76 {offsets = [0, 0], sizes = [8, 96], strides = [1, 1]} : vector<8x128xf32> to vector<8x96xf32>
    %78 = arith.negf %77 : vector<8x96xf32>
    %79 = math.exp %78 : vector<8x96xf32>
    %cst_20 = arith.constant 1.000000e+00 : f32
    %80 = vector.broadcast %cst_20 : f32 to vector<8x96xf32>
    %81 = arith.addf %80, %79 : vector<8x96xf32>
    %82 = arith.divf %80, %81 : vector<8x96xf32>
    %83 = vector.extract_strided_slice %76 {offsets = [0, 96], sizes = [8, 32], strides = [1, 1]} : vector<8x128xf32> to vector<8x32xf32>
    %84 = math.tanh %83 : vector<8x32xf32>
    %85 = vector.extract_strided_slice %82 {offsets = [0, 0], sizes = [8, 32], strides = [1, 1]} : vector<8x96xf32> to vector<8x32xf32>
    %86 = vector.extract_strided_slice %82 {offsets = [0, 32], sizes = [8, 32], strides = [1, 1]} : vector<8x96xf32> to vector<8x32xf32>
    %87 = vector.extract_strided_slice %82 {offsets = [0, 64], sizes = [8, 32], strides = [1, 1]} : vector<8x96xf32> to vector<8x32xf32>
    %88 = arith.mulf %86, %70 : vector<8x32xf32>
    %89 = arith.mulf %85, %84 : vector<8x32xf32>
    %90 = arith.addf %88, %89 : vector<8x32xf32>
    %91 = math.tanh %90 : vector<8x32xf32>
    %92 = arith.mulf %87, %91 : vector<8x32xf32>
    %93 = vector.extract_strided_slice %10 {offsets = [32, 0], sizes = [8, 128], strides = [1, 1]} : vector<64x128xf32> to vector<8x128xf32>
    %94 = arith.truncf %92 : vector<8x32xf32> to vector<8x32xbf16>
    %cst_21 = arith.constant dense<0.000000e+00> : vector<8x128xf32>
    %95 = tpu.matmul %94, %5, %cst_21 {dimension_numbers = #tpu.dot_dimension_numbers<[1], [0], [0], [1], [0, 0, 1, 1], [], []>} : vector<8x32xbf16>, vector<32x128xbf16>, vector<8x128xf32> -> vector<8x128xf32>
    %96 = arith.addf %93, %95 : vector<8x128xf32>
    %97 = vector.extract_strided_slice %96 {offsets = [0, 0], sizes = [8, 96], strides = [1, 1]} : vector<8x128xf32> to vector<8x96xf32>
    %98 = arith.negf %97 : vector<8x96xf32>
    %99 = math.exp %98 : vector<8x96xf32>
    %cst_22 = arith.constant 1.000000e+00 : f32
    %100 = vector.broadcast %cst_22 : f32 to vector<8x96xf32>
    %101 = arith.addf %100, %99 : vector<8x96xf32>
    %102 = arith.divf %100, %101 : vector<8x96xf32>
    %103 = vector.extract_strided_slice %96 {offsets = [0, 96], sizes = [8, 32], strides = [1, 1]} : vector<8x128xf32> to vector<8x32xf32>
    %104 = math.tanh %103 : vector<8x32xf32>
    %105 = vector.extract_strided_slice %102 {offsets = [0, 0], sizes = [8, 32], strides = [1, 1]} : vector<8x96xf32> to vector<8x32xf32>
    %106 = vector.extract_strided_slice %102 {offsets = [0, 32], sizes = [8, 32], strides = [1, 1]} : vector<8x96xf32> to vector<8x32xf32>
    %107 = vector.extract_strided_slice %102 {offsets = [0, 64], sizes = [8, 32], strides = [1, 1]} : vector<8x96xf32> to vector<8x32xf32>
    %108 = arith.mulf %106, %90 : vector<8x32xf32>
    %109 = arith.mulf %105, %104 : vector<8x32xf32>
    %110 = arith.addf %108, %109 : vector<8x32xf32>
    %111 = math.tanh %110 : vector<8x32xf32>
    %112 = arith.mulf %107, %111 : vector<8x32xf32>
    %113 = vector.extract_strided_slice %10 {offsets = [40, 0], sizes = [8, 128], strides = [1, 1]} : vector<64x128xf32> to vector<8x128xf32>
    %114 = arith.truncf %112 : vector<8x32xf32> to vector<8x32xbf16>
    %cst_23 = arith.constant dense<0.000000e+00> : vector<8x128xf32>
    %115 = tpu.matmul %114, %5, %cst_23 {dimension_numbers = #tpu.dot_dimension_numbers<[1], [0], [0], [1], [0, 0, 1, 1], [], []>} : vector<8x32xbf16>, vector<32x128xbf16>, vector<8x128xf32> -> vector<8x128xf32>
    %116 = arith.addf %113, %115 : vector<8x128xf32>
    %117 = vector.extract_strided_slice %116 {offsets = [0, 0], sizes = [8, 96], strides = [1, 1]} : vector<8x128xf32> to vector<8x96xf32>
    %118 = arith.negf %117 : vector<8x96xf32>
    %119 = math.exp %118 : vector<8x96xf32>
    %cst_24 = arith.constant 1.000000e+00 : f32
    %120 = vector.broadcast %cst_24 : f32 to vector<8x96xf32>
    %121 = arith.addf %120, %119 : vector<8x96xf32>
    %122 = arith.divf %120, %121 : vector<8x96xf32>
    %123 = vector.extract_strided_slice %116 {offsets = [0, 96], sizes = [8, 32], strides = [1, 1]} : vector<8x128xf32> to vector<8x32xf32>
    %124 = math.tanh %123 : vector<8x32xf32>
    %125 = vector.extract_strided_slice %122 {offsets = [0, 0], sizes = [8, 32], strides = [1, 1]} : vector<8x96xf32> to vector<8x32xf32>
    %126 = vector.extract_strided_slice %122 {offsets = [0, 32], sizes = [8, 32], strides = [1, 1]} : vector<8x96xf32> to vector<8x32xf32>
    %127 = vector.extract_strided_slice %122 {offsets = [0, 64], sizes = [8, 32], strides = [1, 1]} : vector<8x96xf32> to vector<8x32xf32>
    %128 = arith.mulf %126, %110 : vector<8x32xf32>
    %129 = arith.mulf %125, %124 : vector<8x32xf32>
    %130 = arith.addf %128, %129 : vector<8x32xf32>
    %131 = math.tanh %130 : vector<8x32xf32>
    %132 = arith.mulf %127, %131 : vector<8x32xf32>
    %133 = vector.extract_strided_slice %10 {offsets = [48, 0], sizes = [8, 128], strides = [1, 1]} : vector<64x128xf32> to vector<8x128xf32>
    %134 = arith.truncf %132 : vector<8x32xf32> to vector<8x32xbf16>
    %cst_25 = arith.constant dense<0.000000e+00> : vector<8x128xf32>
    %135 = tpu.matmul %134, %5, %cst_25 {dimension_numbers = #tpu.dot_dimension_numbers<[1], [0], [0], [1], [0, 0, 1, 1], [], []>} : vector<8x32xbf16>, vector<32x128xbf16>, vector<8x128xf32> -> vector<8x128xf32>
    %136 = arith.addf %133, %135 : vector<8x128xf32>
    %137 = vector.extract_strided_slice %136 {offsets = [0, 0], sizes = [8, 96], strides = [1, 1]} : vector<8x128xf32> to vector<8x96xf32>
    %138 = arith.negf %137 : vector<8x96xf32>
    %139 = math.exp %138 : vector<8x96xf32>
    %cst_26 = arith.constant 1.000000e+00 : f32
    %140 = vector.broadcast %cst_26 : f32 to vector<8x96xf32>
    %141 = arith.addf %140, %139 : vector<8x96xf32>
    %142 = arith.divf %140, %141 : vector<8x96xf32>
    %143 = vector.extract_strided_slice %136 {offsets = [0, 96], sizes = [8, 32], strides = [1, 1]} : vector<8x128xf32> to vector<8x32xf32>
    %144 = math.tanh %143 : vector<8x32xf32>
    %145 = vector.extract_strided_slice %142 {offsets = [0, 0], sizes = [8, 32], strides = [1, 1]} : vector<8x96xf32> to vector<8x32xf32>
    %146 = vector.extract_strided_slice %142 {offsets = [0, 32], sizes = [8, 32], strides = [1, 1]} : vector<8x96xf32> to vector<8x32xf32>
    %147 = vector.extract_strided_slice %142 {offsets = [0, 64], sizes = [8, 32], strides = [1, 1]} : vector<8x96xf32> to vector<8x32xf32>
    %148 = arith.mulf %146, %130 : vector<8x32xf32>
    %149 = arith.mulf %145, %144 : vector<8x32xf32>
    %150 = arith.addf %148, %149 : vector<8x32xf32>
    %151 = math.tanh %150 : vector<8x32xf32>
    %152 = arith.mulf %147, %151 : vector<8x32xf32>
    %153 = vector.extract_strided_slice %10 {offsets = [56, 0], sizes = [8, 128], strides = [1, 1]} : vector<64x128xf32> to vector<8x128xf32>
    %154 = arith.truncf %152 : vector<8x32xf32> to vector<8x32xbf16>
    %cst_27 = arith.constant dense<0.000000e+00> : vector<8x128xf32>
    %155 = tpu.matmul %154, %5, %cst_27 {dimension_numbers = #tpu.dot_dimension_numbers<[1], [0], [0], [1], [0, 0, 1, 1], [], []>} : vector<8x32xbf16>, vector<32x128xbf16>, vector<8x128xf32> -> vector<8x128xf32>
    %156 = arith.addf %153, %155 : vector<8x128xf32>
    %157 = vector.extract_strided_slice %156 {offsets = [0, 0], sizes = [8, 96], strides = [1, 1]} : vector<8x128xf32> to vector<8x96xf32>
    %158 = arith.negf %157 : vector<8x96xf32>
    %159 = math.exp %158 : vector<8x96xf32>
    %cst_28 = arith.constant 1.000000e+00 : f32
    %160 = vector.broadcast %cst_28 : f32 to vector<8x96xf32>
    %161 = arith.addf %160, %159 : vector<8x96xf32>
    %162 = arith.divf %160, %161 : vector<8x96xf32>
    %163 = vector.extract_strided_slice %156 {offsets = [0, 96], sizes = [8, 32], strides = [1, 1]} : vector<8x128xf32> to vector<8x32xf32>
    %164 = math.tanh %163 : vector<8x32xf32>
    %165 = vector.extract_strided_slice %162 {offsets = [0, 0], sizes = [8, 32], strides = [1, 1]} : vector<8x96xf32> to vector<8x32xf32>
    %166 = vector.extract_strided_slice %162 {offsets = [0, 32], sizes = [8, 32], strides = [1, 1]} : vector<8x96xf32> to vector<8x32xf32>
    %167 = vector.extract_strided_slice %162 {offsets = [0, 64], sizes = [8, 32], strides = [1, 1]} : vector<8x96xf32> to vector<8x32xf32>
    %168 = arith.mulf %166, %150 : vector<8x32xf32>
    %169 = arith.mulf %165, %164 : vector<8x32xf32>
    %170 = arith.addf %168, %169 : vector<8x32xf32>
    %171 = math.tanh %170 : vector<8x32xf32>
    %172 = arith.mulf %167, %171 : vector<8x32xf32>
    %173 = tpu.concatenate %32, %52, %72, %92, %112, %132, %152, %172 in 0 : vector<8x32xf32>, vector<8x32xf32>, vector<8x32xf32>, vector<8x32xf32>, vector<8x32xf32>, vector<8x32xf32>, vector<8x32xf32>, vector<8x32xf32> -> vector<64x32xf32>
    %174 = arith.truncf %173 : vector<64x32xf32> to vector<64x32xbf16>
    %c1 = arith.constant 1 : index
    %c0_29 = arith.constant 0 : index
    %c0_30 = arith.constant 0 : index
    %175 = vector.load %arg2[%c1, %c0_29, %c0_30] : memref<2x32x128xbf16, #tpu.memory_space<vmem>>, vector<1x32x128xbf16>
    %176 = vector.shape_cast %175 : vector<1x32x128xbf16> to vector<32x128xbf16>
    %c1_31 = arith.constant 1 : index
    %c0_32 = arith.constant 0 : index
    %c0_33 = arith.constant 0 : index
    %177 = vector.load %arg3[%c1_31, %c0_32, %c0_33] : memref<2x32x128xbf16, #tpu.memory_space<vmem>>, vector<1x32x128xbf16>
    %178 = vector.shape_cast %177 : vector<1x32x128xbf16> to vector<32x128xbf16>
    %c1_34 = arith.constant 1 : index
    %c0_35 = arith.constant 0 : index
    %c0_36 = arith.constant 0 : index
    %179 = vector.load %arg4[%c1_34, %c0_35, %c0_36] : memref<2x1x128xf32, #tpu.memory_space<vmem>>, vector<1x1x128xf32>
    %180 = vector.shape_cast %179 : vector<1x1x128xf32> to vector<1x128xf32>
    %cst_37 = arith.constant dense<0.000000e+00> : vector<64x128xf32>
    %181 = tpu.matmul %174, %176, %cst_37 {dimension_numbers = #tpu.dot_dimension_numbers<[1], [0], [0], [1], [0, 0, 1, 1], [], []>} : vector<64x32xbf16>, vector<32x128xbf16>, vector<64x128xf32> -> vector<64x128xf32>
    %182 = vector.broadcast %180 : vector<1x128xf32> to vector<64x128xf32>
    %183 = arith.addf %181, %182 : vector<64x128xf32>
    %cst_38 = arith.constant 0.000000e+00 : f32
    %184 = vector.broadcast %cst_38 : f32 to vector<8x32xf32>
    %cst_39 = arith.constant 0.000000e+00 : f32
    %185 = vector.broadcast %cst_39 : f32 to vector<8x32xf32>
    %186 = vector.extract_strided_slice %183 {offsets = [0, 0], sizes = [8, 128], strides = [1, 1]} : vector<64x128xf32> to vector<8x128xf32>
    %187 = arith.truncf %184 : vector<8x32xf32> to vector<8x32xbf16>
    %cst_40 = arith.constant dense<0.000000e+00> : vector<8x128xf32>
    %188 = tpu.matmul %187, %178, %cst_40 {dimension_numbers = #tpu.dot_dimension_numbers<[1], [0], [0], [1], [0, 0, 1, 1], [], []>} : vector<8x32xbf16>, vector<32x128xbf16>, vector<8x128xf32> -> vector<8x128xf32>
    %189 = arith.addf %186, %188 : vector<8x128xf32>
    %190 = vector.extract_strided_slice %189 {offsets = [0, 0], sizes = [8, 96], strides = [1, 1]} : vector<8x128xf32> to vector<8x96xf32>
    %191 = arith.negf %190 : vector<8x96xf32>
    %192 = math.exp %191 : vector<8x96xf32>
    %cst_41 = arith.constant 1.000000e+00 : f32
    %193 = vector.broadcast %cst_41 : f32 to vector<8x96xf32>
    %194 = arith.addf %193, %192 : vector<8x96xf32>
    %195 = arith.divf %193, %194 : vector<8x96xf32>
    %196 = vector.extract_strided_slice %189 {offsets = [0, 96], sizes = [8, 32], strides = [1, 1]} : vector<8x128xf32> to vector<8x32xf32>
    %197 = math.tanh %196 : vector<8x32xf32>
    %198 = vector.extract_strided_slice %195 {offsets = [0, 0], sizes = [8, 32], strides = [1, 1]} : vector<8x96xf32> to vector<8x32xf32>
    %199 = vector.extract_strided_slice %195 {offsets = [0, 32], sizes = [8, 32], strides = [1, 1]} : vector<8x96xf32> to vector<8x32xf32>
    %200 = vector.extract_strided_slice %195 {offsets = [0, 64], sizes = [8, 32], strides = [1, 1]} : vector<8x96xf32> to vector<8x32xf32>
    %201 = arith.mulf %199, %185 : vector<8x32xf32>
    %202 = arith.mulf %198, %197 : vector<8x32xf32>
    %203 = arith.addf %201, %202 : vector<8x32xf32>
    %204 = math.tanh %203 : vector<8x32xf32>
    %205 = arith.mulf %200, %204 : vector<8x32xf32>
    %206 = vector.extract_strided_slice %183 {offsets = [8, 0], sizes = [8, 128], strides = [1, 1]} : vector<64x128xf32> to vector<8x128xf32>
    %207 = arith.truncf %205 : vector<8x32xf32> to vector<8x32xbf16>
    %cst_42 = arith.constant dense<0.000000e+00> : vector<8x128xf32>
    %208 = tpu.matmul %207, %178, %cst_42 {dimension_numbers = #tpu.dot_dimension_numbers<[1], [0], [0], [1], [0, 0, 1, 1], [], []>} : vector<8x32xbf16>, vector<32x128xbf16>, vector<8x128xf32> -> vector<8x128xf32>
    %209 = arith.addf %206, %208 : vector<8x128xf32>
    %210 = vector.extract_strided_slice %209 {offsets = [0, 0], sizes = [8, 96], strides = [1, 1]} : vector<8x128xf32> to vector<8x96xf32>
    %211 = arith.negf %210 : vector<8x96xf32>
    %212 = math.exp %211 : vector<8x96xf32>
    %cst_43 = arith.constant 1.000000e+00 : f32
    %213 = vector.broadcast %cst_43 : f32 to vector<8x96xf32>
    %214 = arith.addf %213, %212 : vector<8x96xf32>
    %215 = arith.divf %213, %214 : vector<8x96xf32>
    %216 = vector.extract_strided_slice %209 {offsets = [0, 96], sizes = [8, 32], strides = [1, 1]} : vector<8x128xf32> to vector<8x32xf32>
    %217 = math.tanh %216 : vector<8x32xf32>
    %218 = vector.extract_strided_slice %215 {offsets = [0, 0], sizes = [8, 32], strides = [1, 1]} : vector<8x96xf32> to vector<8x32xf32>
    %219 = vector.extract_strided_slice %215 {offsets = [0, 32], sizes = [8, 32], strides = [1, 1]} : vector<8x96xf32> to vector<8x32xf32>
    %220 = vector.extract_strided_slice %215 {offsets = [0, 64], sizes = [8, 32], strides = [1, 1]} : vector<8x96xf32> to vector<8x32xf32>
    %221 = arith.mulf %219, %203 : vector<8x32xf32>
    %222 = arith.mulf %218, %217 : vector<8x32xf32>
    %223 = arith.addf %221, %222 : vector<8x32xf32>
    %224 = math.tanh %223 : vector<8x32xf32>
    %225 = arith.mulf %220, %224 : vector<8x32xf32>
    %226 = vector.extract_strided_slice %183 {offsets = [16, 0], sizes = [8, 128], strides = [1, 1]} : vector<64x128xf32> to vector<8x128xf32>
    %227 = arith.truncf %225 : vector<8x32xf32> to vector<8x32xbf16>
    %cst_44 = arith.constant dense<0.000000e+00> : vector<8x128xf32>
    %228 = tpu.matmul %227, %178, %cst_44 {dimension_numbers = #tpu.dot_dimension_numbers<[1], [0], [0], [1], [0, 0, 1, 1], [], []>} : vector<8x32xbf16>, vector<32x128xbf16>, vector<8x128xf32> -> vector<8x128xf32>
    %229 = arith.addf %226, %228 : vector<8x128xf32>
    %230 = vector.extract_strided_slice %229 {offsets = [0, 0], sizes = [8, 96], strides = [1, 1]} : vector<8x128xf32> to vector<8x96xf32>
    %231 = arith.negf %230 : vector<8x96xf32>
    %232 = math.exp %231 : vector<8x96xf32>
    %cst_45 = arith.constant 1.000000e+00 : f32
    %233 = vector.broadcast %cst_45 : f32 to vector<8x96xf32>
    %234 = arith.addf %233, %232 : vector<8x96xf32>
    %235 = arith.divf %233, %234 : vector<8x96xf32>
    %236 = vector.extract_strided_slice %229 {offsets = [0, 96], sizes = [8, 32], strides = [1, 1]} : vector<8x128xf32> to vector<8x32xf32>
    %237 = math.tanh %236 : vector<8x32xf32>
    %238 = vector.extract_strided_slice %235 {offsets = [0, 0], sizes = [8, 32], strides = [1, 1]} : vector<8x96xf32> to vector<8x32xf32>
    %239 = vector.extract_strided_slice %235 {offsets = [0, 32], sizes = [8, 32], strides = [1, 1]} : vector<8x96xf32> to vector<8x32xf32>
    %240 = vector.extract_strided_slice %235 {offsets = [0, 64], sizes = [8, 32], strides = [1, 1]} : vector<8x96xf32> to vector<8x32xf32>
    %241 = arith.mulf %239, %223 : vector<8x32xf32>
    %242 = arith.mulf %238, %237 : vector<8x32xf32>
    %243 = arith.addf %241, %242 : vector<8x32xf32>
    %244 = math.tanh %243 : vector<8x32xf32>
    %245 = arith.mulf %240, %244 : vector<8x32xf32>
    %246 = vector.extract_strided_slice %183 {offsets = [24, 0], sizes = [8, 128], strides = [1, 1]} : vector<64x128xf32> to vector<8x128xf32>
    %247 = arith.truncf %245 : vector<8x32xf32> to vector<8x32xbf16>
    %cst_46 = arith.constant dense<0.000000e+00> : vector<8x128xf32>
    %248 = tpu.matmul %247, %178, %cst_46 {dimension_numbers = #tpu.dot_dimension_numbers<[1], [0], [0], [1], [0, 0, 1, 1], [], []>} : vector<8x32xbf16>, vector<32x128xbf16>, vector<8x128xf32> -> vector<8x128xf32>
    %249 = arith.addf %246, %248 : vector<8x128xf32>
    %250 = vector.extract_strided_slice %249 {offsets = [0, 0], sizes = [8, 96], strides = [1, 1]} : vector<8x128xf32> to vector<8x96xf32>
    %251 = arith.negf %250 : vector<8x96xf32>
    %252 = math.exp %251 : vector<8x96xf32>
    %cst_47 = arith.constant 1.000000e+00 : f32
    %253 = vector.broadcast %cst_47 : f32 to vector<8x96xf32>
    %254 = arith.addf %253, %252 : vector<8x96xf32>
    %255 = arith.divf %253, %254 : vector<8x96xf32>
    %256 = vector.extract_strided_slice %249 {offsets = [0, 96], sizes = [8, 32], strides = [1, 1]} : vector<8x128xf32> to vector<8x32xf32>
    %257 = math.tanh %256 : vector<8x32xf32>
    %258 = vector.extract_strided_slice %255 {offsets = [0, 0], sizes = [8, 32], strides = [1, 1]} : vector<8x96xf32> to vector<8x32xf32>
    %259 = vector.extract_strided_slice %255 {offsets = [0, 32], sizes = [8, 32], strides = [1, 1]} : vector<8x96xf32> to vector<8x32xf32>
    %260 = vector.extract_strided_slice %255 {offsets = [0, 64], sizes = [8, 32], strides = [1, 1]} : vector<8x96xf32> to vector<8x32xf32>
    %261 = arith.mulf %259, %243 : vector<8x32xf32>
    %262 = arith.mulf %258, %257 : vector<8x32xf32>
    %263 = arith.addf %261, %262 : vector<8x32xf32>
    %264 = math.tanh %263 : vector<8x32xf32>
    %265 = arith.mulf %260, %264 : vector<8x32xf32>
    %266 = vector.extract_strided_slice %183 {offsets = [32, 0], sizes = [8, 128], strides = [1, 1]} : vector<64x128xf32> to vector<8x128xf32>
    %267 = arith.truncf %265 : vector<8x32xf32> to vector<8x32xbf16>
    %cst_48 = arith.constant dense<0.000000e+00> : vector<8x128xf32>
    %268 = tpu.matmul %267, %178, %cst_48 {dimension_numbers = #tpu.dot_dimension_numbers<[1], [0], [0], [1], [0, 0, 1, 1], [], []>} : vector<8x32xbf16>, vector<32x128xbf16>, vector<8x128xf32> -> vector<8x128xf32>
    %269 = arith.addf %266, %268 : vector<8x128xf32>
    %270 = vector.extract_strided_slice %269 {offsets = [0, 0], sizes = [8, 96], strides = [1, 1]} : vector<8x128xf32> to vector<8x96xf32>
    %271 = arith.negf %270 : vector<8x96xf32>
    %272 = math.exp %271 : vector<8x96xf32>
    %cst_49 = arith.constant 1.000000e+00 : f32
    %273 = vector.broadcast %cst_49 : f32 to vector<8x96xf32>
    %274 = arith.addf %273, %272 : vector<8x96xf32>
    %275 = arith.divf %273, %274 : vector<8x96xf32>
    %276 = vector.extract_strided_slice %269 {offsets = [0, 96], sizes = [8, 32], strides = [1, 1]} : vector<8x128xf32> to vector<8x32xf32>
    %277 = math.tanh %276 : vector<8x32xf32>
    %278 = vector.extract_strided_slice %275 {offsets = [0, 0], sizes = [8, 32], strides = [1, 1]} : vector<8x96xf32> to vector<8x32xf32>
    %279 = vector.extract_strided_slice %275 {offsets = [0, 32], sizes = [8, 32], strides = [1, 1]} : vector<8x96xf32> to vector<8x32xf32>
    %280 = vector.extract_strided_slice %275 {offsets = [0, 64], sizes = [8, 32], strides = [1, 1]} : vector<8x96xf32> to vector<8x32xf32>
    %281 = arith.mulf %279, %263 : vector<8x32xf32>
    %282 = arith.mulf %278, %277 : vector<8x32xf32>
    %283 = arith.addf %281, %282 : vector<8x32xf32>
    %284 = math.tanh %283 : vector<8x32xf32>
    %285 = arith.mulf %280, %284 : vector<8x32xf32>
    %286 = vector.extract_strided_slice %183 {offsets = [40, 0], sizes = [8, 128], strides = [1, 1]} : vector<64x128xf32> to vector<8x128xf32>
    %287 = arith.truncf %285 : vector<8x32xf32> to vector<8x32xbf16>
    %cst_50 = arith.constant dense<0.000000e+00> : vector<8x128xf32>
    %288 = tpu.matmul %287, %178, %cst_50 {dimension_numbers = #tpu.dot_dimension_numbers<[1], [0], [0], [1], [0, 0, 1, 1], [], []>} : vector<8x32xbf16>, vector<32x128xbf16>, vector<8x128xf32> -> vector<8x128xf32>
    %289 = arith.addf %286, %288 : vector<8x128xf32>
    %290 = vector.extract_strided_slice %289 {offsets = [0, 0], sizes = [8, 96], strides = [1, 1]} : vector<8x128xf32> to vector<8x96xf32>
    %291 = arith.negf %290 : vector<8x96xf32>
    %292 = math.exp %291 : vector<8x96xf32>
    %cst_51 = arith.constant 1.000000e+00 : f32
    %293 = vector.broadcast %cst_51 : f32 to vector<8x96xf32>
    %294 = arith.addf %293, %292 : vector<8x96xf32>
    %295 = arith.divf %293, %294 : vector<8x96xf32>
    %296 = vector.extract_strided_slice %289 {offsets = [0, 96], sizes = [8, 32], strides = [1, 1]} : vector<8x128xf32> to vector<8x32xf32>
    %297 = math.tanh %296 : vector<8x32xf32>
    %298 = vector.extract_strided_slice %295 {offsets = [0, 0], sizes = [8, 32], strides = [1, 1]} : vector<8x96xf32> to vector<8x32xf32>
    %299 = vector.extract_strided_slice %295 {offsets = [0, 32], sizes = [8, 32], strides = [1, 1]} : vector<8x96xf32> to vector<8x32xf32>
    %300 = vector.extract_strided_slice %295 {offsets = [0, 64], sizes = [8, 32], strides = [1, 1]} : vector<8x96xf32> to vector<8x32xf32>
    %301 = arith.mulf %299, %283 : vector<8x32xf32>
    %302 = arith.mulf %298, %297 : vector<8x32xf32>
    %303 = arith.addf %301, %302 : vector<8x32xf32>
    %304 = math.tanh %303 : vector<8x32xf32>
    %305 = arith.mulf %300, %304 : vector<8x32xf32>
    %306 = vector.extract_strided_slice %183 {offsets = [48, 0], sizes = [8, 128], strides = [1, 1]} : vector<64x128xf32> to vector<8x128xf32>
    %307 = arith.truncf %305 : vector<8x32xf32> to vector<8x32xbf16>
    %cst_52 = arith.constant dense<0.000000e+00> : vector<8x128xf32>
    %308 = tpu.matmul %307, %178, %cst_52 {dimension_numbers = #tpu.dot_dimension_numbers<[1], [0], [0], [1], [0, 0, 1, 1], [], []>} : vector<8x32xbf16>, vector<32x128xbf16>, vector<8x128xf32> -> vector<8x128xf32>
    %309 = arith.addf %306, %308 : vector<8x128xf32>
    %310 = vector.extract_strided_slice %309 {offsets = [0, 0], sizes = [8, 96], strides = [1, 1]} : vector<8x128xf32> to vector<8x96xf32>
    %311 = arith.negf %310 : vector<8x96xf32>
    %312 = math.exp %311 : vector<8x96xf32>
    %cst_53 = arith.constant 1.000000e+00 : f32
    %313 = vector.broadcast %cst_53 : f32 to vector<8x96xf32>
    %314 = arith.addf %313, %312 : vector<8x96xf32>
    %315 = arith.divf %313, %314 : vector<8x96xf32>
    %316 = vector.extract_strided_slice %309 {offsets = [0, 96], sizes = [8, 32], strides = [1, 1]} : vector<8x128xf32> to vector<8x32xf32>
    %317 = math.tanh %316 : vector<8x32xf32>
    %318 = vector.extract_strided_slice %315 {offsets = [0, 0], sizes = [8, 32], strides = [1, 1]} : vector<8x96xf32> to vector<8x32xf32>
    %319 = vector.extract_strided_slice %315 {offsets = [0, 32], sizes = [8, 32], strides = [1, 1]} : vector<8x96xf32> to vector<8x32xf32>
    %320 = vector.extract_strided_slice %315 {offsets = [0, 64], sizes = [8, 32], strides = [1, 1]} : vector<8x96xf32> to vector<8x32xf32>
    %321 = arith.mulf %319, %303 : vector<8x32xf32>
    %322 = arith.mulf %318, %317 : vector<8x32xf32>
    %323 = arith.addf %321, %322 : vector<8x32xf32>
    %324 = math.tanh %323 : vector<8x32xf32>
    %325 = arith.mulf %320, %324 : vector<8x32xf32>
    %326 = vector.extract_strided_slice %183 {offsets = [56, 0], sizes = [8, 128], strides = [1, 1]} : vector<64x128xf32> to vector<8x128xf32>
    %327 = arith.truncf %325 : vector<8x32xf32> to vector<8x32xbf16>
    %cst_54 = arith.constant dense<0.000000e+00> : vector<8x128xf32>
    %328 = tpu.matmul %327, %178, %cst_54 {dimension_numbers = #tpu.dot_dimension_numbers<[1], [0], [0], [1], [0, 0, 1, 1], [], []>} : vector<8x32xbf16>, vector<32x128xbf16>, vector<8x128xf32> -> vector<8x128xf32>
    %329 = arith.addf %326, %328 : vector<8x128xf32>
    %330 = vector.extract_strided_slice %329 {offsets = [0, 0], sizes = [8, 96], strides = [1, 1]} : vector<8x128xf32> to vector<8x96xf32>
    %331 = arith.negf %330 : vector<8x96xf32>
    %332 = math.exp %331 : vector<8x96xf32>
    %cst_55 = arith.constant 1.000000e+00 : f32
    %333 = vector.broadcast %cst_55 : f32 to vector<8x96xf32>
    %334 = arith.addf %333, %332 : vector<8x96xf32>
    %335 = arith.divf %333, %334 : vector<8x96xf32>
    %336 = vector.extract_strided_slice %329 {offsets = [0, 96], sizes = [8, 32], strides = [1, 1]} : vector<8x128xf32> to vector<8x32xf32>
    %337 = math.tanh %336 : vector<8x32xf32>
    %338 = vector.extract_strided_slice %335 {offsets = [0, 0], sizes = [8, 32], strides = [1, 1]} : vector<8x96xf32> to vector<8x32xf32>
    %339 = vector.extract_strided_slice %335 {offsets = [0, 32], sizes = [8, 32], strides = [1, 1]} : vector<8x96xf32> to vector<8x32xf32>
    %340 = vector.extract_strided_slice %335 {offsets = [0, 64], sizes = [8, 32], strides = [1, 1]} : vector<8x96xf32> to vector<8x32xf32>
    %341 = arith.mulf %339, %323 : vector<8x32xf32>
    %342 = arith.mulf %338, %337 : vector<8x32xf32>
    %343 = arith.addf %341, %342 : vector<8x32xf32>
    %344 = math.tanh %343 : vector<8x32xf32>
    %345 = arith.mulf %340, %344 : vector<8x32xf32>
    %346 = tpu.concatenate %345, %343 in 1 : vector<8x32xf32>, vector<8x32xf32> -> vector<8x64xf32>
    %347 = arith.truncf %346 : vector<8x64xf32> to vector<8x64xbf16>
    %c0_56 = arith.constant 0 : index
    %c0_57 = arith.constant 0 : index
    %348 = vector.load %arg5[%c0_56, %c0_57] : memref<64x8xbf16, #tpu.memory_space<vmem>>, vector<64x8xbf16>
    %cst_58 = arith.constant dense<0.000000e+00> : vector<8x8xf32>
    %349 = tpu.matmul %347, %348, %cst_58 {dimension_numbers = #tpu.dot_dimension_numbers<[1], [0], [0], [1], [0, 0, 1, 1], [], []>} : vector<8x64xbf16>, vector<64x8xbf16>, vector<8x8xf32> -> vector<8x8xf32>
    %c0_59 = arith.constant 0 : index
    %c0_60 = arith.constant 0 : index
    %350 = vector.load %arg6[%c0_59, %c0_60] : memref<1x8xf32, #tpu.memory_space<vmem>>, vector<1x8xf32>
    %351 = vector.broadcast %350 : vector<1x8xf32> to vector<8x8xf32>
    %352 = arith.addf %349, %351 : vector<8x8xf32>
    %cst_61 = arith.constant dense<0xFF800000> : vector<8xf32>
    %353 = vector.multi_reduction <maximumf>, %352, %cst_61 [1] : vector<8x8xf32> to vector<8xf32>
    %354 = vector.shape_cast %353 : vector<8xf32> to vector<8x1xf32>
    %355 = vector.broadcast %354 : vector<8x1xf32> to vector<8x8xf32>
    %356 = arith.subf %352, %355 : vector<8x8xf32>
    %357 = math.exp %356 : vector<8x8xf32>
    %cst_62 = arith.constant dense<0.000000e+00> : vector<8xf32>
    %358 = vector.multi_reduction <add>, %357, %cst_62 [1] : vector<8x8xf32> to vector<8xf32>
    %359 = vector.shape_cast %358 : vector<8xf32> to vector<8x1xf32>
    %360 = math.log %359 : vector<8x1xf32>
    %361 = vector.broadcast %360 : vector<8x1xf32> to vector<8x8xf32>
    %362 = arith.subf %356, %361 : vector<8x8xf32>
    %c0_63 = arith.constant 0 : index
    %c0_64 = arith.constant 0 : index
    %363 = vector.load %arg7[%c0_63, %c0_64] : memref<8x8xf32, #tpu.memory_space<vmem>>, vector<8x8xf32>
    tpu.vector_store %arg7[%c0_63, %c0_64], %362 {strides = array<i32>} : memref<8x8xf32, #tpu.memory_space<vmem>>, vector<8x8xf32>,
    return
  }
  func.func @transform_0(%arg0: i32) -> (i32, i32, i32) {
    %c0_i32 = arith.constant 0 : i32
    %c0_i32_0 = arith.constant 0 : i32
    %c0_i32_1 = arith.constant 0 : i32
    return %arg0, %c0_i32, %c0_i32_0 : i32, i32, i32
  }
  func.func @transform_1(%arg0: i32) -> (i32, i32, i32) {
    %c0_i32 = arith.constant 0 : i32
    %c0_i32_0 = arith.constant 0 : i32
    %c0_i32_1 = arith.constant 0 : i32
    %c0_i32_2 = arith.constant 0 : i32
    return %c0_i32, %c0_i32_0, %c0_i32_1 : i32, i32, i32
  }
  func.func @transform_2(%arg0: i32) -> (i32, i32, i32) {
    %c0_i32 = arith.constant 0 : i32
    %c0_i32_0 = arith.constant 0 : i32
    %c0_i32_1 = arith.constant 0 : i32
    %c0_i32_2 = arith.constant 0 : i32
    return %c0_i32, %c0_i32_0, %c0_i32_1 : i32, i32, i32
  }
  func.func @transform_3(%arg0: i32) -> (i32, i32, i32) {
    %c0_i32 = arith.constant 0 : i32
    %c0_i32_0 = arith.constant 0 : i32
    %c0_i32_1 = arith.constant 0 : i32
    %c0_i32_2 = arith.constant 0 : i32
    return %c0_i32, %c0_i32_0, %c0_i32_1 : i32, i32, i32
  }
  func.func @transform_4(%arg0: i32) -> (i32, i32) {
    %c0_i32 = arith.constant 0 : i32
    %c0_i32_0 = arith.constant 0 : i32
    %c0_i32_1 = arith.constant 0 : i32
    return %c0_i32, %c0_i32_0 : i32, i32
  }
  func.func @transform_5(%arg0: i32) -> (i32, i32) {
    %c0_i32 = arith.constant 0 : i32
    %c0_i32_0 = arith.constant 0 : i32
    %c0_i32_1 = arith.constant 0 : i32
    return %c0_i32, %c0_i32_0 : i32, i32
  }
  func.func @transform_6(%arg0: i32) -> (i32, i32) {
    %c0_i32 = arith.constant 0 : i32
    %c0_i32_0 = arith.constant 0 : i32
    return %arg0, %c0_i32 : i32, i32
  }
}

</mosaic_0001>

<llo_original>
// kernel: tpu_custom_call.1
$region0: #{tpu_custom_call.1}
  #allocation0 [shape = 'u32[]', space=smem, size = 0x4, offset = 0x4, fixed_abs, tag = 'smem constant byte address 0x4 - core index']
  #allocation1 [shape = 'u32[72,128]{1,0:T(1,128)}', space=vmem, size = 0x9000, scoped, tag = 'internal scratch']
  %s0 = inlined_call_operand.vmem [shape: bf16[2,64,32], index: 0, kind: input, shape index: {}]
  %s1 = inlined_call_operand.vmem [shape: bf16[2,32,128], index: 1, kind: input, shape index: {}]
  %s2 = inlined_call_operand.vmem [shape: bf16[2,32,128], index: 2, kind: input, shape index: {}]
  %s3 = inlined_call_operand.vmem [shape: f32[2,1,128], index: 3, kind: input, shape index: {}]
  %s4 = inlined_call_operand.vmem [shape: bf16[64,8], index: 4, kind: input, shape index: {}]
  %s5 = inlined_call_operand.vmem [shape: f32[1,8], index: 5, kind: input, shape index: {}]
  %s6 = inlined_call_operand.vmem [shape: f32[16,8], index: 6, kind: output, shape index: {}]
  %s7 = sld [smem:[#allocation0]]
  $region57: #{tpu_custom_call.1} parent=0
    _
  %s9 = ssub.s32 1, %s7
  %s10 = scalar_select 0, %s9, %s7
  loop: start=0, step=1, limit=4
  $region2: #{tpu_custom_call.1} parent=0 // loop_pre_header
    _
  $region3: #{tpu_custom_call.1} parent=0 // loop_header
    %s12 = sphi 0, %s16
    %p13 = scmp.ge.s32.totalorder %s12, 4
    %s22 = sphi 0, %s24
    %s25 = sphi 0, %s22
    %s26 = sphi 0, %s25
    %s42 = sphi 0, %s26
    %s46 = sphi 0, %s46
    %s48 = sphi 0, %s46
    %s49 = sphi 0, %s48
    %s63 = sphi 0, %s49
    %s67 = sphi 0, %s67
    %s69 = sphi 0, %s67
    %s70 = sphi 0, %s69
    %s84 = sphi 0, %s70
    %s88 = sphi 0, %s88
    %s90 = sphi 0, %s88
    %s91 = sphi 0, %s90
    %s105 = sphi 0, %s91
    %s109 = sphi 0, %s109
    %s111 = sphi 0, %s109
    %s112 = sphi 0, %s111
    %s126 = sphi 0, %s112
    %s130 = sphi 0, %s130
    %s132 = sphi 0, %s130
    %s133 = sphi 0, %s132
    %s147 = sphi 0, %s133
    %s153 = sphi 0, %s155
    %s156 = sphi 0, %s153
    %s157 = sphi 0, %s156
    %s173 = sphi 0, %s157
  $region4: #{tpu_custom_call.1} parent=0 // loop_header_branch
    %15 = sbr.rel (%p13) target = $region8
  $region5: #{tpu_custom_call.1} parent=0 // loop_body
    %s17 = ssub.s32 %s12, 1
    %s18 = ssub.s32 %s12, 2
    %s19 = sadd.s32 %s12, 1
    %s20 = ssub.s32 %s12, %s19
    %p21 = scmp.eq.s32.totalorder %s20, 0
    %s23 = sadd.s32 %s22, 1
    %s24 = scalar_select %p21, %s22, %s23
    %p27 = pneg %p21
    %p28 = scmp.eq.s32.totalorder %s12, 1
    %p29 = por %p27, %p28
    %p30 = scmp.ne.s32.totalorder %s22, %s25
    %p31 = scmp.eq.s32.totalorder %s12, 0
    %p32 = por %p30, %p31
    %p33 = scmp.ne.s32.totalorder %s22, %s25
    %p34 = scmp.eq.s32.totalorder %s17, 1
    %p35 = por %p33, %p34
    %p36 = scmp.ne.s32.totalorder %s25, %s26
    %p37 = scmp.eq.s32.totalorder %s17, 0
    %p38 = por %p36, %p37
    %p39 = scmp.ne.s32.totalorder %s25, %s26
    %p40 = scmp.eq.s32.totalorder %s18, 1
    %p41 = por %p39, %p40
    %p43 = scmp.ne.s32.totalorder %s26, %s42
    %p44 = scmp.eq.s32.totalorder %s18, 0
    %p45 = por %p43, %p44
    %s47 = sadd.s32 %s46, 1
    %p50 = scmp.eq.s32.totalorder %s12, 1
    %p51 = scmp.ne.s32.totalorder %s46, %s48
    %p52 = scmp.eq.s32.totalorder %s12, 0
    %p53 = por %p51, %p52
    %p54 = scmp.ne.s32.totalorder %s46, %s48
    %p55 = scmp.eq.s32.totalorder %s17, 1
    %p56 = por %p54, %p55
    %p57 = scmp.ne.s32.totalorder %s48, %s49
    %p58 = scmp.eq.s32.totalorder %s17, 0
    %p59 = por %p57, %p58
    %p60 = scmp.ne.s32.totalorder %s48, %s49
    %p61 = scmp.eq.s32.totalorder %s18, 1
    %p62 = por %p60, %p61
    %p64 = scmp.ne.s32.totalorder %s49, %s63
    %p65 = scmp.eq.s32.totalorder %s18, 0
    %p66 = por %p64, %p65
    %s68 = sadd.s32 %s67, 1
    %p71 = scmp.eq.s32.totalorder %s12, 1
    %p72 = scmp.ne.s32.totalorder %s67, %s69
    %p73 = scmp.eq.s32.totalorder %s12, 0
    %p74 = por %p72, %p73
    %p75 = scmp.ne.s32.totalorder %s67, %s69
    %p76 = scmp.eq.s32.totalorder %s17, 1
    %p77 = por %p75, %p76
    %p78 = scmp.ne.s32.totalorder %s69, %s70
    %p79 = scmp.eq.s32.totalorder %s17, 0
    %p80 = por %p78, %p79
    %p81 = scmp.ne.s32.totalorder %s69, %s70
    %p82 = scmp.eq.s32.totalorder %s18, 1
    %p83 = por %p81, %p82
    %p85 = scmp.ne.s32.totalorder %s70, %s84
    %p86 = scmp.eq.s32.totalorder %s18, 0
    %p87 = por %p85, %p86
    %s89 = sadd.s32 %s88, 1
    %p92 = scmp.eq.s32.totalorder %s12, 1
    %p93 = scmp.ne.s32.totalorder %s88, %s90
    %p94 = scmp.eq.s32.totalorder %s12, 0
    %p95 = por %p93, %p94
    %p96 = scmp.ne.s32.totalorder %s88, %s90
    %p97 = scmp.eq.s32.totalorder %s17, 1
    %p98 = por %p96, %p97
    %p99 = scmp.ne.s32.totalorder %s90, %s91
    %p100 = scmp.eq.s32.totalorder %s17, 0
    %p101 = por %p99, %p100
    %p102 = scmp.ne.s32.totalorder %s90, %s91
    %p103 = scmp.eq.s32.totalorder %s18, 1
    %p104 = por %p102, %p103
    %p106 = scmp.ne.s32.totalorder %s91, %s105
    %p107 = scmp.eq.s32.totalorder %s18, 0
    %p108 = por %p106, %p107
    %s110 = sadd.s32 %s109, 1
    %p113 = scmp.eq.s32.totalorder %s12, 1
    %p114 = scmp.ne.s32.totalorder %s109, %s111
    %p115 = scmp.eq.s32.totalorder %s12, 0
    %p116 = por %p114, %p115
    %p117 = scmp.ne.s32.totalorder %s109, %s111
    %p118 = scmp.eq.s32.totalorder %s17, 1
    %p119 = por %p117, %p118
    %p120 = scmp.ne.s32.totalorder %s111, %s112
    %p121 = scmp.eq.s32.totalorder %s17, 0
    %p122 = por %p120, %p121
    %p123 = scmp.ne.s32.totalorder %s111, %s112
    %p124 = scmp.eq.s32.totalorder %s18, 1
    %p125 = por %p123, %p124
    %p127 = scmp.ne.s32.totalorder %s112, %s126
    %p128 = scmp.eq.s32.totalorder %s18, 0
    %p129 = por %p127, %p128
    %s131 = sadd.s32 %s130, 1
    %p134 = scmp.eq.s32.totalorder %s12, 1
    %p135 = scmp.ne.s32.totalorder %s130, %s132
    %p136 = scmp.eq.s32.totalorder %s12, 0
    %p137 = por %p135, %p136
    %p138 = scmp.ne.s32.totalorder %s130, %s132
    %p139 = scmp.eq.s32.totalorder %s17, 1
    %p140 = por %p138, %p139
    %p141 = scmp.ne.s32.totalorder %s132, %s133
    %p142 = scmp.eq.s32.totalorder %s17, 0
    %p143 = por %p141, %p142
    %p144 = scmp.ne.s32.totalorder %s132, %s133
    %p145 = scmp.eq.s32.totalorder %s18, 1
    %p146 = por %p144, %p145
    %p148 = scmp.ne.s32.totalorder %s133, %s147
    %p149 = scmp.eq.s32.totalorder %s18, 0
    %p150 = por %p148, %p149
    %s151 = ssub.s32 %s12, %s19
    %p152 = scmp.eq.s32.totalorder %s151, 0
    %s154 = sadd.s32 %s153, 1
    %s155 = scalar_select %p152, %s153, %s154
    %p158 = pneg %p152
    %p159 = scmp.eq.s32.totalorder %s12, 1
    %p160 = por %p158, %p159
    %p161 = scmp.ne.s32.totalorder %s153, %s156
    %p162 = scmp.eq.s32.totalorder %s12, 0
    %p163 = por %p161, %p162
    %p164 = scmp.ne.s32.totalorder %s153, %s156
    %p165 = scmp.eq.s32.totalorder %s17, 1
    %p166 = por %p164, %p165
    %p167 = scmp.ne.s32.totalorder %s156, %s157
    %p168 = scmp.eq.s32.totalorder %s17, 0
    %p169 = por %p167, %p168
    %p170 = scmp.ne.s32.totalorder %s156, %s157
    %p171 = scmp.eq.s32.totalorder %s18, 1
    %p172 = por %p170, %p171
    %p174 = scmp.ne.s32.totalorder %s157, %s173
    %p175 = scmp.eq.s32.totalorder %s18, 0
    %p176 = por %p174, %p175
    %p177 = scmp.le.s32.totalorder 1, %s12
    %p178 = scmp.lt.s32.totalorder %s12, 3
    %p179 = pnand %p177, %p178
    %p180 = pneg %p179
    // Predicated region
    $region9: #{tpu_custom_call.1} parent=5 // pred_check
      _
    $region10: #{tpu_custom_call.1} parent=5 // pred_check_branch
      %182 = sbr.rel (%p179) target = $region12
    $region11: #{tpu_custom_call.1} parent=5 // pred_region
      %s183 = ssub.s32 %s12, 1
      // Predicated region
      $region13: #{tpu_custom_call.1} parent=11 // pred_check
        %p184 = pneg %p59
      $region14: #{tpu_custom_call.1} parent=11 // pred_check_branch
        %186 = sbr.rel (%p184) target = $region16
      $region15: #{tpu_custom_call.1} parent=11 // pred_region
        _
      $region16: #{tpu_custom_call.1} parent=11 // pred_fallthru
        _
      // Predicated region
      $region17: #{tpu_custom_call.1} parent=11 // pred_check
        %p187 = pneg %p80
      $region18: #{tpu_custom_call.1} parent=11 // pred_check_branch
        %189 = sbr.rel (%p187) target = $region20
      $region19: #{tpu_custom_call.1} parent=11 // pred_region
        _
      $region20: #{tpu_custom_call.1} parent=11 // pred_fallthru
        _
      // Predicated region
      $region21: #{tpu_custom_call.1} parent=11 // pred_check
        %p190 = pneg %p101
      $region22: #{tpu_custom_call.1} parent=11 // pred_check_branch
        %192 = sbr.rel (%p190) target = $region24
      $region23: #{tpu_custom_call.1} parent=11 // pred_region
        _
      $region24: #{tpu_custom_call.1} parent=11 // pred_fallthru
        _
      // Predicated region
      $region25: #{tpu_custom_call.1} parent=11 // pred_check
        %p193 = pneg %p122
      $region26: #{tpu_custom_call.1} parent=11 // pred_check_branch
        %195 = sbr.rel (%p193) target = $region28
      $region27: #{tpu_custom_call.1} parent=11 // pred_region
        _
      $region28: #{tpu_custom_call.1} parent=11 // pred_fallthru
        _
      // Predicated region
      $region29: #{tpu_custom_call.1} parent=11 // pred_check
        %p196 = pneg %p143
      $region30: #{tpu_custom_call.1} parent=11 // pred_check_branch
        %198 = sbr.rel (%p196) target = $region32
      $region31: #{tpu_custom_call.1} parent=11 // pred_region
        _
      $region32: #{tpu_custom_call.1} parent=11 // pred_fallthru
        _
    $region12: #{tpu_custom_call.1} parent=5 // pred_fallthru
      _
    %p199 = scmp.lt.s32.totalorder %s12, 2
    // Predicated region
    $region33: #{tpu_custom_call.1} parent=5 // pred_check
      %p200 = pneg %p199
    $region34: #{tpu_custom_call.1} parent=5 // pred_check_branch
      %202 = sbr.rel (%p200) target = $region36
    $region35: #{tpu_custom_call.1} parent=5 // pred_region
      // Predicated region
      $region37: #{tpu_custom_call.1} parent=35 // pred_check
        %p203 = pneg %p32
      $region38: #{tpu_custom_call.1} parent=35 // pred_check_branch
        %205 = sbr.rel (%p203) target = $region40
      $region39: #{tpu_custom_call.1} parent=35 // pred_region
        %p206 = scmp.lt.s32.totalorder %s12, 1
        %s207 = scalar_select %p206, %s12, 1
        %s208 = smul.addr %s207, 8
        %s209 = smul.addr %s208, 4
        %s210 = scalar_lea.vmem %s0, %s209
      $region40: #{tpu_custom_call.1} parent=35 // pred_fallthru
        _
    $region36: #{tpu_custom_call.1} parent=5 // pred_fallthru
      _
    %p211 = scmp.le.s32.totalorder 1, %s12
    %p212 = scmp.lt.s32.totalorder %s12, 3
    %p213 = pnand %p211, %p212
    %p214 = pneg %p213
    // Predicated region
    $region41: #{tpu_custom_call.1} parent=5 // pred_check
      _
    $region42: #{tpu_custom_call.1} parent=5 // pred_check_branch
      %216 = sbr.rel (%p213) target = $region44
    $region43: #{tpu_custom_call.1} parent=5 // pred_region
      %s217 = ssub.s32 %s12, 1
      %p218 = scmp.lt.s32.totalorder %s17, 1
      %s219 = scalar_select %p218, %s17, 1
      %s220 = smul.addr %s219, 8
      %s221 = smul.addr %s220, 4
      %s222 = scalar_lea.vmem %s0, %s221
      %p223 = pneg %p38
      %p224 = pneg %p35
      %p225 = pneg %p59
      %p226 = pneg %p56
      %p227 = pneg %p80
      %p228 = pneg %p77
      %p229 = pneg %p101
      %p230 = pneg %p98
      %p231 = pneg %p122
      %p232 = pneg %p119
      %p233 = pneg %p143
      %p234 = pneg %p140
      %p235 = pneg %p169
      %p236 = pneg %p166
      %p237 = scmp.lt.s32.totalorder %s17, 1
      %s238 = scalar_select %p237, %s17, 1
      %s239 = smul.addr %s238, 8
      %s240 = scalar_lea.vmem %s6, %s239
      %p241 = scmp.lt.s32.totalorder %s17, 1
      %s242 = scalar_select %p241, %s17, 1
      %s243 = smul.addr %s242, 8
      %s244 = smul.addr %s243, 4
      %s245 = scalar_lea.vmem %s0, %s244
      %p246 = scmp.lt.s32.totalorder %s17, 1
      %s247 = scalar_select %p246, %s17, 1
      %s248 = smul.addr %s247, 8
      %s249 = scalar_lea.vmem %s6, %s248
      %v251 = vld [vmem:[%s245] sm:$0xf]
      %v252 = vld [vmem:[%s245 + $0x4] sm:$0xf]
      %v253 = vld [vmem:[%s245 + $0x8] sm:$0xf]
      %v254 = vld [vmem:[%s245 + $0xc] sm:$0xf]
      %v255 = vld [vmem:[%s245 + $0x10] sm:$0xf]
      %v256 = vld [vmem:[%s245 + $0x14] sm:$0xf]
      %v257 = vld [vmem:[%s245 + $0x18] sm:$0xf]
      %v258 = vld [vmem:[%s245 + $0x1c] sm:$0xf]
      %v259 = vld [vmem:[%s1] sm:$0xf]
      %v260 = vld [vmem:[%s1 + $0x4] sm:$0xf]
      %v261 = vld [vmem:[%s1 + $0x8] sm:$0xf]
      %v262 = vld [vmem:[%s1 + $0xc] sm:$0xf]
      %v263 = vld [vmem:[%s2] sm:$0xf]
      %v264 = vld [vmem:[%s2 + $0x4] sm:$0xf]
      %v265 = vld [vmem:[%s2 + $0x8] sm:$0xf]
      %v266 = vld [vmem:[%s2 + $0xc] sm:$0xf]
      %v267 = vld [vmem:[%s3] sm:$0x1]
      %v269 = vperm.slane %v267, 0
      %v279 = vunpack.c.l.b16 %v251
      %v280 = vunpack.c.l.b16 %v252
      %v281 = vunpack.c.l.b16 %v253
      %v282 = vunpack.c.l.b16 %v254
      %v283 = vunpack.c.l.b16 %v255
      %v284 = vunpack.c.l.b16 %v256
      %v285 = vunpack.c.l.b16 %v257
      %v286 = vunpack.c.l.b16 %v258
      %v287 = vpack.c.b16 %v280, %v279
      %v288 = vpack.c.b16 %v282, %v281
      %v289 = vpack.c.b16 %v284, %v283
      %v290 = vpack.c.b16 %v286, %v285
      %v295 = vunpack.c.l.b16 %v259
      %v296 = vunpack.c.l.b16 %v260
      %v297 = vunpack.c.l.b16 %v261
      %v298 = vunpack.c.l.b16 %v262
      %v299 = vpack.c.b16 %v296, %v295
      %v300 = vpack.c.b16 %v298, %v297
      %vm303 = vcmask 261120
      %v305 = vsel %vm303, %v287, 0
      %v308 = vsel %vm303, %v288, 0
      %v311 = vsel %vm303, %v289, 0
      %v314 = vsel %vm303, %v290, 0
      %316 = vmatpush.bf16.msra.mxu0 0
      %317 = vmatpush.bf16.msra.mxu0 0
      %318 = vmatpush.bf16.msra.mxu0 0
      %319 = vmatpush.bf16.msra.mxu0 0
      %320 = vmatpush.bf16.msra.mxu0 0
      %321 = vmatpush.bf16.msra.mxu0 0
      %322 = vmatpush.bf16.msra.mxu0 %v300
      %323 = vmatpush.bf16.msra.mxu0 %v299
      %324 = vmatmul.bf16.gmra.mxu0 %v305
      %v325 = vpop.f32.mrf.mxu0
      %v326 = vadd.f32 %v269, %v325
      %v327 = vpop.f32.mrf.mxu0
      %v328 = vadd.f32 %v269, %v327
      %329 = vmatmul.bf16.gmra.mxu0 %v308
      %v330 = vpop.f32.mrf.mxu0
      %v331 = vadd.f32 %v269, %v330
      %v332 = vpop.f32.mrf.mxu0
      %v333 = vadd.f32 %v269, %v332
      %334 = vmatmul.bf16.gmra.mxu0 %v311
      %v335 = vpop.f32.mrf.mxu0
      %v336 = vadd.f32 %v269, %v335
      %v337 = vpop.f32.mrf.mxu0
      %v338 = vadd.f32 %v269, %v337
      %339 = vmatmul.bf16.gmra.mxu0 %v314
      %v340 = vpop.f32.mrf.mxu0
      %v341 = vadd.f32 %v269, %v340
      %v342 = vpop.f32.mrf.mxu0
      %v343 = vadd.f32 %v269, %v342
      %344 = vdwg.mxu0
      %v349 = vunpack.c.l.b16 %v263
      %v350 = vunpack.c.l.b16 %v264
      %v351 = vunpack.c.l.b16 %v265
      %v352 = vunpack.c.l.b16 %v266
      %v353 = vpack.c.b16 %v350, %v349
      %v354 = vpack.c.b16 %v352, %v351
      %v358 = vsel %vm303, 0, 0
      %360 = vmatpush.bf16.msra.mxu0 0
      %361 = vmatpush.bf16.msra.mxu0 0
      %362 = vmatpush.bf16.msra.mxu0 0
      %363 = vmatpush.bf16.msra.mxu0 0
      %364 = vmatpush.bf16.msra.mxu0 0
      %365 = vmatpush.bf16.msra.mxu0 0
      %366 = vmatpush.bf16.msra.mxu0 %v354
      %367 = vmatpush.bf16.msra.mxu0 %v353
      %368 = vmatmul.bf16.gmra.mxu0 %v358
      %v369 = vpop.f32.mrf.mxu0
      %v370 = vadd.f32 0.0, %v369
      %v371 = vpop.f32.mrf.mxu0
      %372 = vdwg.mxu0
      %v373 = vadd.f32 %v326, %v370
      %v374 = vxor.u32 %v373, 2147483648
      %v375 = vmul.f32 %v374, 1.442695
      %v376 = vpow.pop %v375
      %v377 = vadd.f32 %v376, 1.0
      %v378 = vrcp.pop %v377
      %v379 = vmul.f32 %v377, %v378
      %v380 = vsub.f32 1.0, %v379
      %v381 = vmul.f32 %v378, %v380
      %v382 = vadd.f32 %v378, %v381
      %vm383 = vweird.f32 %v377
      %vm384 = vweird.f32 %v378
      %vm385 = vmor %vm383, %vm384
      %v386 = vsel %vm385, %v378, %v382
      %v387 = vand.u32 2147483647, %v377
      %vm388 = vcmp.eq.f32.partialorder %v387, 8.507059e+37
      %v389 = vand.u32 %v377, 2147483648
      %v390 = vor.u32 1.1754944e-38, %v389
      %v391 = vsel %vm388, %v390, %v386
      %v392 = vmul.f32 1.0, %v391
      %v393 = vtanh.pop %v373
      %v394 = vmul.f32 %v392, 0.0
      %396 = vrot.lane.b32.xlu0 %v393, 32
      %v397 = vpop.permute.xlu0 %396
      %v399 = vmul.f32 %v392, %v397
      %401 = vrot.lane.b32.xlu0 %v399, 32
      %v402 = vpop.permute.xlu0 %401
      %v404 = vadd.f32 %v394, %v402
      %v405 = vtanh.pop %v404
      %407 = vrot.lane.b32.xlu0 %v405, 32
      %v408 = vpop.permute.xlu0 %407
      %v410 = vmul.f32 %v392, %v408
      %v411 = vpack.c.bf16 %v410, %v410
      %413 = vrot.lane.b32.xlu0 %v411, 64
      %v414 = vpop.permute.xlu0 %413
      %v416 = vsel %vm303, %v414, 0
      %418 = vmatpush.bf16.msra.mxu0 0
      %419 = vmatpush.bf16.msra.mxu0 0
      %420 = vmatpush.bf16.msra.mxu0 0
      %421 = vmatpush.bf16.msra.mxu0 0
      %422 = vmatpush.bf16.msra.mxu0 0
      %423 = vmatpush.bf16.msra.mxu0 0
      %424 = vmatpush.bf16.msra.mxu0 %v354
      %425 = vmatpush.bf16.msra.mxu0 %v353
      %426 = vmatmul.bf16.gmra.mxu0 %v416
      %v427 = vpop.f32.mrf.mxu0
      %v428 = vadd.f32 0.0, %v427
      %v429 = vpop.f32.mrf.mxu0
      %430 = vdwg.mxu0
      %v431 = vadd.f32 %v328, %v428
      %v432 = vxor.u32 %v431, 2147483648
      %v433 = vmul.f32 %v432, 1.442695
      %v434 = vpow.pop %v433
      %v435 = vadd.f32 %v434, 1.0
      %v436 = vrcp.pop %v435
      %v437 = vmul.f32 %v435, %v436
      %v438 = vsub.f32 1.0, %v437
      %v439 = vmul.f32 %v436, %v438
      %v440 = vadd.f32 %v436, %v439
      %vm441 = vweird.f32 %v435
      %vm442 = vweird.f32 %v436
      %vm443 = vmor %vm441, %vm442
      %v444 = vsel %vm443, %v436, %v440
      %v445 = vand.u32 2147483647, %v435
      %vm446 = vcmp.eq.f32.partialorder %v445, 8.507059e+37
      %v447 = vand.u32 %v435, 2147483648
      %v448 = vor.u32 1.1754944e-38, %v447
      %v449 = vsel %vm446, %v448, %v444
      %v450 = vmul.f32 1.0, %v449
      %v451 = vtanh.pop %v431
      %v452 = vmul.f32 %v450, %v404
      %454 = vrot.lane.b32.xlu0 %v451, 32
      %v455 = vpop.permute.xlu0 %454
      %v457 = vmul.f32 %v450, %v455
      %459 = vrot.lane.b32.xlu0 %v457, 32
      %v460 = vpop.permute.xlu0 %459
      %v462 = vadd.f32 %v452, %v460
      %v463 = vtanh.pop %v462
      %465 = vrot.lane.b32.xlu0 %v463, 32
      %v466 = vpop.permute.xlu0 %465
      %v468 = vmul.f32 %v450, %v466
      %v469 = vpack.c.bf16 %v468, %v468
      %471 = vrot.lane.b32.xlu0 %v469, 64
      %v472 = vpop.permute.xlu0 %471
      %v474 = vsel %vm303, %v472, 0
      %476 = vmatpush.bf16.msra.mxu0 0
      %477 = vmatpush.bf16.msra.mxu0 0
      %478 = vmatpush.bf16.msra.mxu0 0
      %479 = vmatpush.bf16.msra.mxu0 0
      %480 = vmatpush.bf16.msra.mxu0 0
      %481 = vmatpush.bf16.msra.mxu0 0
      %482 = vmatpush.bf16.msra.mxu0 %v354
      %483 = vmatpush.bf16.msra.mxu0 %v353
      %484 = vmatmul.bf16.gmra.mxu0 %v474
      %v485 = vpop.f32.mrf.mxu0
      %v486 = vadd.f32 0.0, %v485
      %v487 = vpop.f32.mrf.mxu0
      %488 = vdwg.mxu0
      %v489 = vadd.f32 %v331, %v486
      %v490 = vxor.u32 %v489, 2147483648
      %v491 = vmul.f32 %v490, 1.442695
      %v492 = vpow.pop %v491
      %v493 = vadd.f32 %v492, 1.0
      %v494 = vrcp.pop %v493
      %v495 = vmul.f32 %v493, %v494
      %v496 = vsub.f32 1.0, %v495
      %v497 = vmul.f32 %v494, %v496
      %v498 = vadd.f32 %v494, %v497
      %vm499 = vweird.f32 %v493
      %vm500 = vweird.f32 %v494
      %vm501 = vmor %vm499, %vm500
      %v502 = vsel %vm501, %v494, %v498
      %v503 = vand.u32 2147483647, %v493
      %vm504 = vcmp.eq.f32.partialorder %v503, 8.507059e+37
      %v505 = vand.u32 %v493, 2147483648
      %v506 = vor.u32 1.1754944e-38, %v505
      %v507 = vsel %vm504, %v506, %v502
      %v508 = vmul.f32 1.0, %v507
      %v509 = vtanh.pop %v489
      %v510 = vmul.f32 %v508, %v462
      %512 = vrot.lane.b32.xlu0 %v509, 32
      %v513 = vpop.permute.xlu0 %512
      %v515 = vmul.f32 %v508, %v513
      %517 = vrot.lane.b32.xlu0 %v515, 32
      %v518 = vpop.permute.xlu0 %517
      %v520 = vadd.f32 %v510, %v518
      %v521 = vtanh.pop %v520
      %523 = vrot.lane.b32.xlu0 %v521, 32
      %v524 = vpop.permute.xlu0 %523
      %v526 = vmul.f32 %v508, %v524
      %v527 = vpack.c.bf16 %v526, %v526
      %529 = vrot.lane.b32.xlu0 %v527, 64
      %v530 = vpop.permute.xlu0 %529
      %v532 = vsel %vm303, %v530, 0
      %534 = vmatpush.bf16.msra.mxu0 0
      %535 = vmatpush.bf16.msra.mxu0 0
      %536 = vmatpush.bf16.msra.mxu0 0
      %537 = vmatpush.bf16.msra.mxu0 0
      %538 = vmatpush.bf16.msra.mxu0 0
      %539 = vmatpush.bf16.msra.mxu0 0
      %540 = vmatpush.bf16.msra.mxu0 %v354
      %541 = vmatpush.bf16.msra.mxu0 %v353
      %542 = vmatmul.bf16.gmra.mxu0 %v532
      %v543 = vpop.f32.mrf.mxu0
      %v544 = vadd.f32 0.0, %v543
      %v545 = vpop.f32.mrf.mxu0
      %546 = vdwg.mxu0
      %v547 = vadd.f32 %v333, %v544
      %v548 = vxor.u32 %v547, 2147483648
      %v549 = vmul.f32 %v548, 1.442695
      %v550 = vpow.pop %v549
      %v551 = vadd.f32 %v550, 1.0
      %v552 = vrcp.pop %v551
      %v553 = vmul.f32 %v551, %v552
      %v554 = vsub.f32 1.0, %v553
      %v555 = vmul.f32 %v552, %v554
      %v556 = vadd.f32 %v552, %v555
      %vm557 = vweird.f32 %v551
      %vm558 = vweird.f32 %v552
      %vm559 = vmor %vm557, %vm558
      %v560 = vsel %vm559, %v552, %v556
      %v561 = vand.u32 2147483647, %v551
      %vm562 = vcmp.eq.f32.partialorder %v561, 8.507059e+37
      %v563 = vand.u32 %v551, 2147483648
      %v564 = vor.u32 1.1754944e-38, %v563
      %v565 = vsel %vm562, %v564, %v560
      %v566 = vmul.f32 1.0, %v565
      %v567 = vtanh.pop %v547
      %v568 = vmul.f32 %v566, %v520
      %570 = vrot.lane.b32.xlu0 %v567, 32
      %v571 = vpop.permute.xlu0 %570
      %v573 = vmul.f32 %v566, %v571
      %575 = vrot.lane.b32.xlu0 %v573, 32
      %v576 = vpop.permute.xlu0 %575
      %v578 = vadd.f32 %v568, %v576
      %v579 = vtanh.pop %v578
      %581 = vrot.lane.b32.xlu0 %v579, 32
      %v582 = vpop.permute.xlu0 %581
      %v584 = vmul.f32 %v566, %v582
      %v585 = vpack.c.bf16 %v584, %v584
      %587 = vrot.lane.b32.xlu0 %v585, 64
      %v588 = vpop.permute.xlu0 %587
      %v590 = vsel %vm303, %v588, 0
      %592 = vmatpush.bf16.msra.mxu0 0
      %593 = vmatpush.bf16.msra.mxu0 0
      %594 = vmatpush.bf16.msra.mxu0 0
      %595 = vmatpush.bf16.msra.mxu0 0
      %596 = vmatpush.bf16.msra.mxu0 0
      %597 = vmatpush.bf16.msra.mxu0 0
      %598 = vmatpush.bf16.msra.mxu0 %v354
      %599 = vmatpush.bf16.msra.mxu0 %v353
      %600 = vmatmul.bf16.gmra.mxu0 %v590
      %v601 = vpop.f32.mrf.mxu0
      %v602 = vadd.f32 0.0, %v601
      %v603 = vpop.f32.mrf.mxu0
      %604 = vdwg.mxu0
      %v605 = vadd.f32 %v336, %v602
      %v606 = vxor.u32 %v605, 2147483648
      %v607 = vmul.f32 %v606, 1.442695
      %v608 = vpow.pop %v607
      %v609 = vadd.f32 %v608, 1.0
      %v610 = vrcp.pop %v609
      %v611 = vmul.f32 %v609, %v610
      %v612 = vsub.f32 1.0, %v611
      %v613 = vmul.f32 %v610, %v612
      %v614 = vadd.f32 %v610, %v613
      %vm615 = vweird.f32 %v609
      %vm616 = vweird.f32 %v610
      %vm617 = vmor %vm615, %vm616
      %v618 = vsel %vm617, %v610, %v614
      %v619 = vand.u32 2147483647, %v609
      %vm620 = vcmp.eq.f32.partialorder %v619, 8.507059e+37
      %v621 = vand.u32 %v609, 2147483648
      %v622 = vor.u32 1.1754944e-38, %v621
      %v623 = vsel %vm620, %v622, %v618
      %v624 = vmul.f32 1.0, %v623
      %v625 = vtanh.pop %v605
      %v626 = vmul.f32 %v624, %v578
      %628 = vrot.lane.b32.xlu0 %v625, 32
      %v629 = vpop.permute.xlu0 %628
      %v631 = vmul.f32 %v624, %v629
      %633 = vrot.lane.b32.xlu0 %v631, 32
      %v634 = vpop.permute.xlu0 %633
      %v636 = vadd.f32 %v626, %v634
      %v637 = vtanh.pop %v636
      %639 = vrot.lane.b32.xlu0 %v637, 32
      %v640 = vpop.permute.xlu0 %639
      %v642 = vmul.f32 %v624, %v640
      %v643 = vpack.c.bf16 %v642, %v642
      %645 = vrot.lane.b32.xlu0 %v643, 64
      %v646 = vpop.permute.xlu0 %645
      %v648 = vsel %vm303, %v646, 0
      %650 = vmatpush.bf16.msra.mxu0 0
      %651 = vmatpush.bf16.msra.mxu0 0
      %652 = vmatpush.bf16.msra.mxu0 0
      %653 = vmatpush.bf16.msra.mxu0 0
      %654 = vmatpush.bf16.msra.mxu0 0
      %655 = vmatpush.bf16.msra.mxu0 0
      %656 = vmatpush.bf16.msra.mxu0 %v354
      %657 = vmatpush.bf16.msra.mxu0 %v353
      %658 = vmatmul.bf16.gmra.mxu0 %v648
      %v659 = vpop.f32.mrf.mxu0
      %v660 = vadd.f32 0.0, %v659
      %v661 = vpop.f32.mrf.mxu0
      %662 = vdwg.mxu0
      %v663 = vadd.f32 %v338, %v660
      %v664 = vxor.u32 %v663, 2147483648
      %v665 = vmul.f32 %v664, 1.442695
      %v666 = vpow.pop %v665
      %v667 = vadd.f32 %v666, 1.0
      %v668 = vrcp.pop %v667
      %v669 = vmul.f32 %v667, %v668
      %v670 = vsub.f32 1.0, %v669
      %v671 = vmul.f32 %v668, %v670
      %v672 = vadd.f32 %v668, %v671
      %vm673 = vweird.f32 %v667
      %vm674 = vweird.f32 %v668
      %vm675 = vmor %vm673, %vm674
      %v676 = vsel %vm675, %v668, %v672
      %v677 = vand.u32 2147483647, %v667
      %vm678 = vcmp.eq.f32.partialorder %v677, 8.507059e+37
      %v679 = vand.u32 %v667, 2147483648
      %v680 = vor.u32 1.1754944e-38, %v679
      %v681 = vsel %vm678, %v680, %v676
      %v682 = vmul.f32 1.0, %v681
      %v683 = vtanh.pop %v663
      %v684 = vmul.f32 %v682, %v636
      %686 = vrot.lane.b32.xlu0 %v683, 32
      %v687 = vpop.permute.xlu0 %686
      %v689 = vmul.f32 %v682, %v687
      %691 = vrot.lane.b32.xlu0 %v689, 32
      %v692 = vpop.permute.xlu0 %691
      %v694 = vadd.f32 %v684, %v692
      %v695 = vtanh.pop %v694
      %697 = vrot.lane.b32.xlu0 %v695, 32
      %v698 = vpop.permute.xlu0 %697
      %v700 = vmul.f32 %v682, %v698
      %v701 = vpack.c.bf16 %v700, %v700
      %703 = vrot.lane.b32.xlu0 %v701, 64
      %v704 = vpop.permute.xlu0 %703
      %v706 = vsel %vm303, %v704, 0
      %708 = vmatpush.bf16.msra.mxu0 0
      %709 = vmatpush.bf16.msra.mxu0 0
      %710 = vmatpush.bf16.msra.mxu0 0
      %711 = vmatpush.bf16.msra.mxu0 0
      %712 = vmatpush.bf16.msra.mxu0 0
      %713 = vmatpush.bf16.msra.mxu0 0
      %714 = vmatpush.bf16.msra.mxu0 %v354
      %715 = vmatpush.bf16.msra.mxu0 %v353
      %716 = vmatmul.bf16.gmra.mxu0 %v706
      %v717 = vpop.f32.mrf.mxu0
      %v718 = vadd.f32 0.0, %v717
      %v719 = vpop.f32.mrf.mxu0
      %720 = vdwg.mxu0
      %v721 = vadd.f32 %v341, %v718
      %v722 = vxor.u32 %v721, 2147483648
      %v723 = vmul.f32 %v722, 1.442695
      %v724 = vpow.pop %v723
      %v725 = vadd.f32 %v724, 1.0
      %v726 = vrcp.pop %v725
      %v727 = vmul.f32 %v725, %v726
      %v728 = vsub.f32 1.0, %v727
      %v729 = vmul.f32 %v726, %v728
      %v730 = vadd.f32 %v726, %v729
      %vm731 = vweird.f32 %v725
      %vm732 = vweird.f32 %v726
      %vm733 = vmor %vm731, %vm732
      %v734 = vsel %vm733, %v726, %v730
      %v735 = vand.u32 2147483647, %v725
      %vm736 = vcmp.eq.f32.partialorder %v735, 8.507059e+37
      %v737 = vand.u32 %v725, 2147483648
      %v738 = vor.u32 1.1754944e-38, %v737
      %v739 = vsel %vm736, %v738, %v734
      %v740 = vmul.f32 1.0, %v739
      %v741 = vtanh.pop %v721
      %v742 = vmul.f32 %v740, %v694
      %744 = vrot.lane.b32.xlu0 %v741, 32
      %v745 = vpop.permute.xlu0 %744
      %v747 = vmul.f32 %v740, %v745
      %749 = vrot.lane.b32.xlu0 %v747, 32
      %v750 = vpop.permute.xlu0 %749
      %v752 = vadd.f32 %v742, %v750
      %v753 = vtanh.pop %v752
      %755 = vrot.lane.b32.xlu0 %v753, 32
      %v756 = vpop.permute.xlu0 %755
      %v758 = vmul.f32 %v740, %v756
      %v759 = vpack.c.bf16 %v758, %v758
      %761 = vrot.lane.b32.xlu0 %v759, 64
      %v762 = vpop.permute.xlu0 %761
      %v764 = vsel %vm303, %v762, 0
      %766 = vmatpush.bf16.msra.mxu0 0
      %767 = vmatpush.bf16.msra.mxu0 0
      %768 = vmatpush.bf16.msra.mxu0 0
      %769 = vmatpush.bf16.msra.mxu0 0
      %770 = vmatpush.bf16.msra.mxu0 0
      %771 = vmatpush.bf16.msra.mxu0 0
      %772 = vmatpush.bf16.msra.mxu0 %v354
      %773 = vmatpush.bf16.msra.mxu0 %v353
      %774 = vmatmul.bf16.gmra.mxu0 %v764
      %v775 = vpop.f32.mrf.mxu0
      %v776 = vadd.f32 0.0, %v775
      %v777 = vpop.f32.mrf.mxu0
      %778 = vdwg.mxu0
      %v779 = vadd.f32 %v343, %v776
      %v780 = vxor.u32 %v779, 2147483648
      %v781 = vmul.f32 %v780, 1.442695
      %v782 = vpow.pop %v781
      %v783 = vadd.f32 %v782, 1.0
      %v784 = vrcp.pop %v783
      %v785 = vmul.f32 %v783, %v784
      %v786 = vsub.f32 1.0, %v785
      %v787 = vmul.f32 %v784, %v786
      %v788 = vadd.f32 %v784, %v787
      %vm789 = vweird.f32 %v783
      %vm790 = vweird.f32 %v784
      %vm791 = vmor %vm789, %vm790
      %v792 = vsel %vm791, %v784, %v788
      %v793 = vand.u32 2147483647, %v783
      %vm794 = vcmp.eq.f32.partialorder %v793, 8.507059e+37
      %v795 = vand.u32 %v783, 2147483648
      %v796 = vor.u32 1.1754944e-38, %v795
      %v797 = vsel %vm794, %v796, %v792
      %v798 = vmul.f32 1.0, %v797
      %v799 = vtanh.pop %v779
      %v800 = vmul.f32 %v798, %v752
      %802 = vrot.lane.b32.xlu0 %v799, 32
      %v803 = vpop.permute.xlu0 %802
      %v805 = vmul.f32 %v798, %v803
      %807 = vrot.lane.b32.xlu0 %v805, 32
      %v808 = vpop.permute.xlu0 %807
      %v810 = vadd.f32 %v800, %v808
      %v811 = vtanh.pop %v810
      %813 = vrot.lane.b32.xlu0 %v811, 32
      %v814 = vpop.permute.xlu0 %813
      %v816 = vmul.f32 %v798, %v814
      %v817 = vpack.c.bf16 %v468, %v410
      %v818 = vpack.c.bf16 %v584, %v526
      %v819 = vpack.c.bf16 %v700, %v642
      %v820 = vpack.c.bf16 %v816, %v758
      %s821 = scalar_lea.vmem %s1, 16
      %v822 = vld [vmem:[%s821] sm:$0xf]
      %v823 = vld [vmem:[%s821 + $0x4] sm:$0xf]
      %v824 = vld [vmem:[%s821 + $0x8] sm:$0xf]
      %v825 = vld [vmem:[%s821 + $0xc] sm:$0xf]
      %s826 = scalar_lea.vmem %s2, 16
      %v827 = vld [vmem:[%s826] sm:$0xf]
      %v828 = vld [vmem:[%s826 + $0x4] sm:$0xf]
      %v829 = vld [vmem:[%s826 + $0x8] sm:$0xf]
      %v830 = vld [vmem:[%s826 + $0xc] sm:$0xf]
      %s831 = scalar_lea.vmem %s3, 1
      %v832 = vld [vmem:[%s831] sm:$0x1]
      %v834 = vperm.slane %v832, 0
      %840 = vrot.lane.b32.xlu0 %v817, 64
      %v841 = vpop.permute.xlu0 %840
      %842 = vrot.lane.b32.xlu0 %v818, 64
      %v843 = vpop.permute.xlu0 %842
      %844 = vrot.lane.b32.xlu0 %v819, 64
      %v845 = vpop.permute.xlu0 %844
      %846 = vrot.lane.b32.xlu0 %v820, 64
      %v847 = vpop.permute.xlu0 %846
      %v852 = vunpack.c.l.b16 %v822
      %v853 = vunpack.c.l.b16 %v823
      %v854 = vunpack.c.l.b16 %v824
      %v855 = vunpack.c.l.b16 %v825
      %v856 = vpack.c.b16 %v853, %v852
      %v857 = vpack.c.b16 %v855, %v854
      %v861 = vsel %vm303, %v841, 0
      %v864 = vsel %vm303, %v843, 0
      %v867 = vsel %vm303, %v845, 0
      %v870 = vsel %vm303, %v847, 0
      %872 = vmatpush.bf16.msra.mxu0 0
      %873 = vmatpush.bf16.msra.mxu0 0
      %874 = vmatpush.bf16.msra.mxu0 0
      %875 = vmatpush.bf16.msra.mxu0 0
      %876 = vmatpush.bf16.msra.mxu0 0
      %877 = vmatpush.bf16.msra.mxu0 0
      %878 = vmatpush.bf16.msra.mxu0 %v857
      %879 = vmatpush.bf16.msra.mxu0 %v856
      %880 = vmatmul.bf16.gmra.mxu0 %v861
      %v881 = vpop.f32.mrf.mxu0
      %v882 = vadd.f32 %v834, %v881
      %v883 = vpop.f32.mrf.mxu0
      %v884 = vadd.f32 %v834, %v883
      %885 = vmatmul.bf16.gmra.mxu0 %v864
      %v886 = vpop.f32.mrf.mxu0
      %v887 = vadd.f32 %v834, %v886
      %v888 = vpop.f32.mrf.mxu0
      %v889 = vadd.f32 %v834, %v888
      %890 = vmatmul.bf16.gmra.mxu0 %v867
      %v891 = vpop.f32.mrf.mxu0
      %v892 = vadd.f32 %v834, %v891
      %v893 = vpop.f32.mrf.mxu0
      %v894 = vadd.f32 %v834, %v893
      %895 = vmatmul.bf16.gmra.mxu0 %v870
      %v896 = vpop.f32.mrf.mxu0
      %v897 = vadd.f32 %v834, %v896
      %v898 = vpop.f32.mrf.mxu0
      %v899 = vadd.f32 %v834, %v898
      %900 = vdwg.mxu0
      %v905 = vunpack.c.l.b16 %v827
      %v906 = vunpack.c.l.b16 %v828
      %v907 = vunpack.c.l.b16 %v829
      %v908 = vunpack.c.l.b16 %v830
      %v909 = vpack.c.b16 %v906, %v905
      %v910 = vpack.c.b16 %v908, %v907
      %913 = vmatpush.bf16.msra.mxu0 0
      %914 = vmatpush.bf16.msra.mxu0 0
      %915 = vmatpush.bf16.msra.mxu0 0
      %916 = vmatpush.bf16.msra.mxu0 0
      %917 = vmatpush.bf16.msra.mxu0 0
      %918 = vmatpush.bf16.msra.mxu0 0
      %919 = vmatpush.bf16.msra.mxu0 %v910
      %920 = vmatpush.bf16.msra.mxu0 %v909
      %921 = vmatmul.bf16.gmra.mxu0 %v358
      %v922 = vpop.f32.mrf.mxu0
      %v923 = vadd.f32 0.0, %v922
      %v924 = vpop.f32.mrf.mxu0
      %925 = vdwg.mxu0
      %v926 = vadd.f32 %v882, %v923
      %v927 = vxor.u32 %v926, 2147483648
      %v928 = vmul.f32 %v927, 1.442695
      %v929 = vpow.pop %v928
      %v930 = vadd.f32 %v929, 1.0
      %v931 = vrcp.pop %v930
      %v932 = vmul.f32 %v930, %v931
      %v933 = vsub.f32 1.0, %v932
      %v934 = vmul.f32 %v931, %v933
      %v935 = vadd.f32 %v931, %v934
      %vm936 = vweird.f32 %v930
      %vm937 = vweird.f32 %v931
      %vm938 = vmor %vm936, %vm937
      %v939 = vsel %vm938, %v931, %v935
      %v940 = vand.u32 2147483647, %v930
      %vm941 = vcmp.eq.f32.partialorder %v940, 8.507059e+37
      %v942 = vand.u32 %v930, 2147483648
      %v943 = vor.u32 1.1754944e-38, %v942
      %v944 = vsel %vm941, %v943, %v939
      %v945 = vmul.f32 1.0, %v944
      %v946 = vtanh.pop %v926
      %v947 = vmul.f32 %v945, 0.0
      %949 = vrot.lane.b32.xlu0 %v946, 32
      %v950 = vpop.permute.xlu0 %949
      %v952 = vmul.f32 %v945, %v950
      %954 = vrot.lane.b32.xlu0 %v952, 32
      %v955 = vpop.permute.xlu0 %954
      %v957 = vadd.f32 %v947, %v955
      %v958 = vtanh.pop %v957
      %960 = vrot.lane.b32.xlu0 %v958, 32
      %v961 = vpop.permute.xlu0 %960
      %v963 = vmul.f32 %v945, %v961
      %v964 = vpack.c.bf16 %v963, %v963
      %966 = vrot.lane.b32.xlu0 %v964, 64
      %v967 = vpop.permute.xlu0 %966
      %v969 = vsel %vm303, %v967, 0
      %971 = vmatpush.bf16.msra.mxu0 0
      %972 = vmatpush.bf16.msra.mxu0 0
      %973 = vmatpush.bf16.msra.mxu0 0
      %974 = vmatpush.bf16.msra.mxu0 0
      %975 = vmatpush.bf16.msra.mxu0 0
      %976 = vmatpush.bf16.msra.mxu0 0
      %977 = vmatpush.bf16.msra.mxu0 %v910
      %978 = vmatpush.bf16.msra.mxu0 %v909
      %979 = vmatmul.bf16.gmra.mxu0 %v969
      %v980 = vpop.f32.mrf.mxu0
      %v981 = vadd.f32 0.0, %v980
      %v982 = vpop.f32.mrf.mxu0
      %983 = vdwg.mxu0
      %v984 = vadd.f32 %v884, %v981
      %v985 = vxor.u32 %v984, 2147483648
      %v986 = vmul.f32 %v985, 1.442695
      %v987 = vpow.pop %v986
      %v988 = vadd.f32 %v987, 1.0
      %v989 = vrcp.pop %v988
      %v990 = vmul.f32 %v988, %v989
      %v991 = vsub.f32 1.0, %v990
      %v992 = vmul.f32 %v989, %v991
      %v993 = vadd.f32 %v989, %v992
      %vm994 = vweird.f32 %v988
      %vm995 = vweird.f32 %v989
      %vm996 = vmor %vm994, %vm995
      %v997 = vsel %vm996, %v989, %v993
      %v998 = vand.u32 2147483647, %v988
      %vm999 = vcmp.eq.f32.partialorder %v998, 8.507059e+37
      %v1000 = vand.u32 %v988, 2147483648
      %v1001 = vor.u32 1.1754944e-38, %v1000
      %v1002 = vsel %vm999, %v1001, %v997
      %v1003 = vmul.f32 1.0, %v1002
      %v1004 = vtanh.pop %v984
      %v1005 = vmul.f32 %v1003, %v957
      %1007 = vrot.lane.b32.xlu0 %v1004, 32
      %v1008 = vpop.permute.xlu0 %1007
      %v1010 = vmul.f32 %v1003, %v1008
      %1012 = vrot.lane.b32.xlu0 %v1010, 32
      %v1013 = vpop.permute.xlu0 %1012
      %v1015 = vadd.f32 %v1005, %v1013
      %v1016 = vtanh.pop %v1015
      %1018 = vrot.lane.b32.xlu0 %v1016, 32
      %v1019 = vpop.permute.xlu0 %1018
      %v1021 = vmul.f32 %v1003, %v1019
      %v1022 = vpack.c.bf16 %v1021, %v1021
      %1024 = vrot.lane.b32.xlu0 %v1022, 64
      %v1025 = vpop.permute.xlu0 %1024
      %v1027 = vsel %vm303, %v1025, 0
      %1029 = vmatpush.bf16.msra.mxu0 0
      %1030 = vmatpush.bf16.msra.mxu0 0
      %1031 = vmatpush.bf16.msra.mxu0 0
      %1032 = vmatpush.bf16.msra.mxu0 0
      %1033 = vmatpush.bf16.msra.mxu0 0
      %1034 = vmatpush.bf16.msra.mxu0 0
      %1035 = vmatpush.bf16.msra.mxu0 %v910
      %1036 = vmatpush.bf16.msra.mxu0 %v909
      %1037 = vmatmul.bf16.gmra.mxu0 %v1027
      %v1038 = vpop.f32.mrf.mxu0
      %v1039 = vadd.f32 0.0, %v1038
      %v1040 = vpop.f32.mrf.mxu0
      %1041 = vdwg.mxu0
      %v1042 = vadd.f32 %v887, %v1039
      %v1043 = vxor.u32 %v1042, 2147483648
      %v1044 = vmul.f32 %v1043, 1.442695
      %v1045 = vpow.pop %v1044
      %v1046 = vadd.f32 %v1045, 1.0
      %v1047 = vrcp.pop %v1046
      %v1048 = vmul.f32 %v1046, %v1047
      %v1049 = vsub.f32 1.0, %v1048
      %v1050 = vmul.f32 %v1047, %v1049
      %v1051 = vadd.f32 %v1047, %v1050
      %vm1052 = vweird.f32 %v1046
      %vm1053 = vweird.f32 %v1047
      %vm1054 = vmor %vm1052, %vm1053
      %v1055 = vsel %vm1054, %v1047, %v1051
      %v1056 = vand.u32 2147483647, %v1046
      %vm1057 = vcmp.eq.f32.partialorder %v1056, 8.507059e+37
      %v1058 = vand.u32 %v1046, 2147483648
      %v1059 = vor.u32 1.1754944e-38, %v1058
      %v1060 = vsel %vm1057, %v1059, %v1055
      %v1061 = vmul.f32 1.0, %v1060
      %v1062 = vtanh.pop %v1042
      %v1063 = vmul.f32 %v1061, %v1015
      %1065 = vrot.lane.b32.xlu0 %v1062, 32
      %v1066 = vpop.permute.xlu0 %1065
      %v1068 = vmul.f32 %v1061, %v1066
      %1070 = vrot.lane.b32.xlu0 %v1068, 32
      %v1071 = vpop.permute.xlu0 %1070
      %v1073 = vadd.f32 %v1063, %v1071
      %v1074 = vtanh.pop %v1073
      %1076 = vrot.lane.b32.xlu0 %v1074, 32
      %v1077 = vpop.permute.xlu0 %1076
      %v1079 = vmul.f32 %v1061, %v1077
      %v1080 = vpack.c.bf16 %v1079, %v1079
      %1082 = vrot.lane.b32.xlu0 %v1080, 64
      %v1083 = vpop.permute.xlu0 %1082
      %v1085 = vsel %vm303, %v1083, 0
      %1087 = vmatpush.bf16.msra.mxu0 0
      %1088 = vmatpush.bf16.msra.mxu0 0
      %1089 = vmatpush.bf16.msra.mxu0 0
      %1090 = vmatpush.bf16.msra.mxu0 0
      %1091 = vmatpush.bf16.msra.mxu0 0
      %1092 = vmatpush.bf16.msra.mxu0 0
      %1093 = vmatpush.bf16.msra.mxu0 %v910
      %1094 = vmatpush.bf16.msra.mxu0 %v909
      %1095 = vmatmul.bf16.gmra.mxu0 %v1085
      %v1096 = vpop.f32.mrf.mxu0
      %v1097 = vadd.f32 0.0, %v1096
      %v1098 = vpop.f32.mrf.mxu0
      %1099 = vdwg.mxu0
      %v1100 = vadd.f32 %v889, %v1097
      %v1101 = vxor.u32 %v1100, 2147483648
      %v1102 = vmul.f32 %v1101, 1.442695
      %v1103 = vpow.pop %v1102
      %v1104 = vadd.f32 %v1103, 1.0
      %v1105 = vrcp.pop %v1104
      %v1106 = vmul.f32 %v1104, %v1105
      %v1107 = vsub.f32 1.0, %v1106
      %v1108 = vmul.f32 %v1105, %v1107
      %v1109 = vadd.f32 %v1105, %v1108
      %vm1110 = vweird.f32 %v1104
      %vm1111 = vweird.f32 %v1105
      %vm1112 = vmor %vm1110, %vm1111
      %v1113 = vsel %vm1112, %v1105, %v1109
      %v1114 = vand.u32 2147483647, %v1104
      %vm1115 = vcmp.eq.f32.partialorder %v1114, 8.507059e+37
      %v1116 = vand.u32 %v1104, 2147483648
      %v1117 = vor.u32 1.1754944e-38, %v1116
      %v1118 = vsel %vm1115, %v1117, %v1113
      %v1119 = vmul.f32 1.0, %v1118
      %v1120 = vtanh.pop %v1100
      %v1121 = vmul.f32 %v1119, %v1073
      %1123 = vrot.lane.b32.xlu0 %v1120, 32
      %v1124 = vpop.permute.xlu0 %1123
      %v1126 = vmul.f32 %v1119, %v1124
      %1128 = vrot.lane.b32.xlu0 %v1126, 32
      %v1129 = vpop.permute.xlu0 %1128
      %v1131 = vadd.f32 %v1121, %v1129
      %v1132 = vtanh.pop %v1131
      %1134 = vrot.lane.b32.xlu0 %v1132, 32
      %v1135 = vpop.permute.xlu0 %1134
      %v1137 = vmul.f32 %v1119, %v1135
      %v1138 = vpack.c.bf16 %v1137, %v1137
      %1140 = vrot.lane.b32.xlu0 %v1138, 64
      %v1141 = vpop.permute.xlu0 %1140
      %v1143 = vsel %vm303, %v1141, 0
      %1145 = vmatpush.bf16.msra.mxu0 0
      %1146 = vmatpush.bf16.msra.mxu0 0
      %1147 = vmatpush.bf16.msra.mxu0 0
      %1148 = vmatpush.bf16.msra.mxu0 0
      %1149 = vmatpush.bf16.msra.mxu0 0
      %1150 = vmatpush.bf16.msra.mxu0 0
      %1151 = vmatpush.bf16.msra.mxu0 %v910
      %1152 = vmatpush.bf16.msra.mxu0 %v909
      %1153 = vmatmul.bf16.gmra.mxu0 %v1143
      %v1154 = vpop.f32.mrf.mxu0
      %v1155 = vadd.f32 0.0, %v1154
      %v1156 = vpop.f32.mrf.mxu0
      %1157 = vdwg.mxu0
      %v1158 = vadd.f32 %v892, %v1155
      %v1159 = vxor.u32 %v1158, 2147483648
      %v1160 = vmul.f32 %v1159, 1.442695
      %v1161 = vpow.pop %v1160
      %v1162 = vadd.f32 %v1161, 1.0
      %v1163 = vrcp.pop %v1162
      %v1164 = vmul.f32 %v1162, %v1163
      %v1165 = vsub.f32 1.0, %v1164
      %v1166 = vmul.f32 %v1163, %v1165
      %v1167 = vadd.f32 %v1163, %v1166
      %vm1168 = vweird.f32 %v1162
      %vm1169 = vweird.f32 %v1163
      %vm1170 = vmor %vm1168, %vm1169
      %v1171 = vsel %vm1170, %v1163, %v1167
      %v1172 = vand.u32 2147483647, %v1162
      %vm1173 = vcmp.eq.f32.partialorder %v1172, 8.507059e+37
      %v1174 = vand.u32 %v1162, 2147483648
      %v1175 = vor.u32 1.1754944e-38, %v1174
      %v1176 = vsel %vm1173, %v1175, %v1171
      %v1177 = vmul.f32 1.0, %v1176
      %v1178 = vtanh.pop %v1158
      %v1179 = vmul.f32 %v1177, %v1131
      %1181 = vrot.lane.b32.xlu0 %v1178, 32
      %v1182 = vpop.permute.xlu0 %1181
      %v1184 = vmul.f32 %v1177, %v1182
      %1186 = vrot.lane.b32.xlu0 %v1184, 32
      %v1187 = vpop.permute.xlu0 %1186
      %v1189 = vadd.f32 %v1179, %v1187
      %v1190 = vtanh.pop %v1189
      %1192 = vrot.lane.b32.xlu0 %v1190, 32
      %v1193 = vpop.permute.xlu0 %1192
      %v1195 = vmul.f32 %v1177, %v1193
      %v1196 = vpack.c.bf16 %v1195, %v1195
      %1198 = vrot.lane.b32.xlu0 %v1196, 64
      %v1199 = vpop.permute.xlu0 %1198
      %v1201 = vsel %vm303, %v1199, 0
      %1203 = vmatpush.bf16.msra.mxu0 0
      %1204 = vmatpush.bf16.msra.mxu0 0
      %1205 = vmatpush.bf16.msra.mxu0 0
      %1206 = vmatpush.bf16.msra.mxu0 0
      %1207 = vmatpush.bf16.msra.mxu0 0
      %1208 = vmatpush.bf16.msra.mxu0 0
      %1209 = vmatpush.bf16.msra.mxu0 %v910
      %1210 = vmatpush.bf16.msra.mxu0 %v909
      %1211 = vmatmul.bf16.gmra.mxu0 %v1201
      %v1212 = vpop.f32.mrf.mxu0
      %v1213 = vadd.f32 0.0, %v1212
      %v1214 = vpop.f32.mrf.mxu0
      %1215 = vdwg.mxu0
      %v1216 = vadd.f32 %v894, %v1213
      %v1217 = vxor.u32 %v1216, 2147483648
      %v1218 = vmul.f32 %v1217, 1.442695
      %v1219 = vpow.pop %v1218
      %v1220 = vadd.f32 %v1219, 1.0
      %v1221 = vrcp.pop %v1220
      %v1222 = vmul.f32 %v1220, %v1221
      %v1223 = vsub.f32 1.0, %v1222
      %v1224 = vmul.f32 %v1221, %v1223
      %v1225 = vadd.f32 %v1221, %v1224
      %vm1226 = vweird.f32 %v1220
      %vm1227 = vweird.f32 %v1221
      %vm1228 = vmor %vm1226, %vm1227
      %v1229 = vsel %vm1228, %v1221, %v1225
      %v1230 = vand.u32 2147483647, %v1220
      %vm1231 = vcmp.eq.f32.partialorder %v1230, 8.507059e+37
      %v1232 = vand.u32 %v1220, 2147483648
      %v1233 = vor.u32 1.1754944e-38, %v1232
      %v1234 = vsel %vm1231, %v1233, %v1229
      %v1235 = vmul.f32 1.0, %v1234
      %v1236 = vtanh.pop %v1216
      %v1237 = vmul.f32 %v1235, %v1189
      %1239 = vrot.lane.b32.xlu0 %v1236, 32
      %v1240 = vpop.permute.xlu0 %1239
      %v1242 = vmul.f32 %v1235, %v1240
      %1244 = vrot.lane.b32.xlu0 %v1242, 32
      %v1245 = vpop.permute.xlu0 %1244
      %v1247 = vadd.f32 %v1237, %v1245
      %v1248 = vtanh.pop %v1247
      %1250 = vrot.lane.b32.xlu0 %v1248, 32
      %v1251 = vpop.permute.xlu0 %1250
      %v1253 = vmul.f32 %v1235, %v1251
      %v1254 = vpack.c.bf16 %v1253, %v1253
      %1256 = vrot.lane.b32.xlu0 %v1254, 64
      %v1257 = vpop.permute.xlu0 %1256
      %v1259 = vsel %vm303, %v1257, 0
      %1261 = vmatpush.bf16.msra.mxu0 0
      %1262 = vmatpush.bf16.msra.mxu0 0
      %1263 = vmatpush.bf16.msra.mxu0 0
      %1264 = vmatpush.bf16.msra.mxu0 0
      %1265 = vmatpush.bf16.msra.mxu0 0
      %1266 = vmatpush.bf16.msra.mxu0 0
      %1267 = vmatpush.bf16.msra.mxu0 %v910
      %1268 = vmatpush.bf16.msra.mxu0 %v909
      %1269 = vmatmul.bf16.gmra.mxu0 %v1259
      %v1270 = vpop.f32.mrf.mxu0
      %v1271 = vadd.f32 0.0, %v1270
      %v1272 = vpop.f32.mrf.mxu0
      %1273 = vdwg.mxu0
      %v1274 = vadd.f32 %v897, %v1271
      %v1275 = vxor.u32 %v1274, 2147483648
      %v1276 = vmul.f32 %v1275, 1.442695
      %v1277 = vpow.pop %v1276
      %v1278 = vadd.f32 %v1277, 1.0
      %v1279 = vrcp.pop %v1278
      %v1280 = vmul.f32 %v1278, %v1279
      %v1281 = vsub.f32 1.0, %v1280
      %v1282 = vmul.f32 %v1279, %v1281
      %v1283 = vadd.f32 %v1279, %v1282
      %vm1284 = vweird.f32 %v1278
      %vm1285 = vweird.f32 %v1279
      %vm1286 = vmor %vm1284, %vm1285
      %v1287 = vsel %vm1286, %v1279, %v1283
      %v1288 = vand.u32 2147483647, %v1278
      %vm1289 = vcmp.eq.f32.partialorder %v1288, 8.507059e+37
      %v1290 = vand.u32 %v1278, 2147483648
      %v1291 = vor.u32 1.1754944e-38, %v1290
      %v1292 = vsel %vm1289, %v1291, %v1287
      %v1293 = vmul.f32 1.0, %v1292
      %v1294 = vtanh.pop %v1274
      %v1295 = vmul.f32 %v1293, %v1247
      %1297 = vrot.lane.b32.xlu0 %v1294, 32
      %v1298 = vpop.permute.xlu0 %1297
      %v1300 = vmul.f32 %v1293, %v1298
      %1302 = vrot.lane.b32.xlu0 %v1300, 32
      %v1303 = vpop.permute.xlu0 %1302
      %v1305 = vadd.f32 %v1295, %v1303
      %v1306 = vtanh.pop %v1305
      %1308 = vrot.lane.b32.xlu0 %v1306, 32
      %v1309 = vpop.permute.xlu0 %1308
      %v1311 = vmul.f32 %v1293, %v1309
      %v1312 = vpack.c.bf16 %v1311, %v1311
      %1314 = vrot.lane.b32.xlu0 %v1312, 64
      %v1315 = vpop.permute.xlu0 %1314
      %v1317 = vsel %vm303, %v1315, 0
      %1319 = vmatpush.bf16.msra.mxu0 0
      %1320 = vmatpush.bf16.msra.mxu0 0
      %1321 = vmatpush.bf16.msra.mxu0 0
      %1322 = vmatpush.bf16.msra.mxu0 0
      %1323 = vmatpush.bf16.msra.mxu0 0
      %1324 = vmatpush.bf16.msra.mxu0 0
      %1325 = vmatpush.bf16.msra.mxu0 %v910
      %1326 = vmatpush.bf16.msra.mxu0 %v909
      %1327 = vmatmul.bf16.gmra.mxu0 %v1317
      %v1328 = vpop.f32.mrf.mxu0
      %v1329 = vadd.f32 0.0, %v1328
      %v1330 = vpop.f32.mrf.mxu0
      %1331 = vdwg.mxu0
      %v1332 = vadd.f32 %v899, %v1329
      %v1333 = vxor.u32 %v1332, 2147483648
      %v1334 = vmul.f32 %v1333, 1.442695
      %v1335 = vpow.pop %v1334
      %v1336 = vadd.f32 %v1335, 1.0
      %v1337 = vrcp.pop %v1336
      %v1338 = vmul.f32 %v1336, %v1337
      %v1339 = vsub.f32 1.0, %v1338
      %v1340 = vmul.f32 %v1337, %v1339
      %v1341 = vadd.f32 %v1337, %v1340
      %vm1342 = vweird.f32 %v1336
      %vm1343 = vweird.f32 %v1337
      %vm1344 = vmor %vm1342, %vm1343
      %v1345 = vsel %vm1344, %v1337, %v1341
      %v1346 = vand.u32 2147483647, %v1336
      %vm1347 = vcmp.eq.f32.partialorder %v1346, 8.507059e+37
      %v1348 = vand.u32 %v1336, 2147483648
      %v1349 = vor.u32 1.1754944e-38, %v1348
      %v1350 = vsel %vm1347, %v1349, %v1345
      %v1351 = vmul.f32 1.0, %v1350
      %v1352 = vtanh.pop %v1332
      %v1353 = vmul.f32 %v1351, %v1305
      %1355 = vrot.lane.b32.xlu0 %v1352, 32
      %v1356 = vpop.permute.xlu0 %1355
      %v1358 = vmul.f32 %v1351, %v1356
      %1360 = vrot.lane.b32.xlu0 %v1358, 32
      %v1361 = vpop.permute.xlu0 %1360
      %v1363 = vadd.f32 %v1353, %v1361
      %v1364 = vtanh.pop %v1363
      %1366 = vrot.lane.b32.xlu0 %v1364, 32
      %v1367 = vpop.permute.xlu0 %1366
      %v1369 = vmul.f32 %v1351, %v1367
      %1371 = vrot.lane.b32.xlu0 %v1369, 64
      %v1372 = vpop.permute.xlu0 %1371
      %v1374 = vsel %vm303, %v1372, %v1363
      %v1375 = vpack.c.bf16 %v1374, %v1374
      %v1376 = vld [vmem:[%s4] sm:$0xf]
      %v1377 = vld [vmem:[%s4 + $0x4] sm:$0xf]
      %v1378 = vld [vmem:[%s4 + $0x8] sm:$0xf]
      %v1379 = vld [vmem:[%s4 + $0xc] sm:$0xf]
      %v1380 = vld [vmem:[%s4 + $0x10] sm:$0xf]
      %v1381 = vld [vmem:[%s4 + $0x14] sm:$0xf]
      %v1382 = vld [vmem:[%s4 + $0x18] sm:$0xf]
      %v1383 = vld [vmem:[%s4 + $0x1c] sm:$0xf]
      %v1384 = vld [vmem:[%s5] sm:$0x1]
      %v1386 = vperm.slane %v1384, 0
      %v1396 = vunpack.c.l.b16 %v1376
      %v1397 = vunpack.c.l.b16 %v1377
      %v1398 = vunpack.c.l.b16 %v1378
      %v1399 = vunpack.c.l.b16 %v1379
      %v1400 = vunpack.c.l.b16 %v1380
      %v1401 = vunpack.c.l.b16 %v1381
      %v1402 = vunpack.c.l.b16 %v1382
      %v1403 = vunpack.c.l.b16 %v1383
      %v1404 = vpack.c.b16 %v1397, %v1396
      %v1405 = vpack.c.b16 %v1399, %v1398
      %v1406 = vpack.c.b16 %v1401, %v1400
      %v1407 = vpack.c.b16 %v1403, %v1402
      %vm1412 = vcmask 523264
      %v1414 = vsel %vm1412, %v1375, 0
      %1416 = vmatpush.bf16.msra.mxu0 0
      %1417 = vmatpush.bf16.msra.mxu0 0
      %1418 = vmatpush.bf16.msra.mxu0 0
      %1419 = vmatpush.bf16.msra.mxu0 0
      %1420 = vmatpush.bf16.msra.mxu0 %v1407
      %1421 = vmatpush.bf16.msra.mxu0 %v1406
      %1422 = vmatpush.bf16.msra.mxu0 %v1405
      %1423 = vmatpush.bf16.msra.mxu0 %v1404
      %1424 = vmatmul.bf16.gmra.mxu0 %v1414
      %v1425 = vpop.f32.mrf.mxu0
      %v1426 = vadd.f32 %v1386, %v1425
      %v1427 = vpop.f32.mrf.mxu0
      %1428 = vdwg.mxu0
      %vm1429 = vcmask 64512
      %v1430 = vsel %vm1429, %v1426, -inf
      %1431 = vmax.xlane.f32.xlu0 %v1430
      %v1432 = vpop.xlane.xlu0 %1431
      %v1433 = vsub.f32 %v1426, %v1432
      %v1434 = vmul.f32 %v1433, 1.442695
      %v1435 = vpow.pop %v1434
      %v1436 = vsel %vm1429, %v1435, 0.0
      %1437 = vadd.xlane.f32.xlu0 %v1436
      %v1438 = vpop.xlane.xlu0 %1437
      %v1439 = vlog2.pop %v1438
      %v1440 = vmul.f32 %v1439, 0.6931472
      %v1441 = vsub.f32 %v1433, %v1440
      %1442 = vst.msk [vmem:[%s249] sm:$0xff] %vm1429, %v1441
      %p1443 = scmp.lt.s32.totalorder %s17, 1
      %s1444 = scalar_select %p1443, %s17, 1
      %s1445 = smul.addr %s1444, 8
      %s1446 = scalar_lea.vmem %s6, %s1445
      // Predicated region
      $region45: #{tpu_custom_call.1} parent=43 // pred_check
        %p1447 = pneg %p166
      $region46: #{tpu_custom_call.1} parent=43 // pred_check_branch
        %1449 = sbr.rel (%p1447) target = $region48
      $region47: #{tpu_custom_call.1} parent=43 // pred_region
        _
      $region48: #{tpu_custom_call.1} parent=43 // pred_fallthru
        _
    $region44: #{tpu_custom_call.1} parent=5 // pred_fallthru
      _
    %p1450 = scmp.le.s32.totalorder 2, %s12
    // Predicated region
    $region49: #{tpu_custom_call.1} parent=5 // pred_check
      %p1451 = pneg %p1450
    $region50: #{tpu_custom_call.1} parent=5 // pred_check_branch
      %1453 = sbr.rel (%p1451) target = $region52
    $region51: #{tpu_custom_call.1} parent=5 // pred_region
      %s1454 = ssub.s32 %s12, 2
      // Predicated region
      $region53: #{tpu_custom_call.1} parent=51 // pred_check
        %p1455 = pneg %p172
      $region54: #{tpu_custom_call.1} parent=51 // pred_check_branch
        %1457 = sbr.rel (%p1455) target = $region56
      $region55: #{tpu_custom_call.1} parent=51 // pred_region
        %p1458 = scmp.lt.s32.totalorder %s18, 1
        %s1459 = scalar_select %p1458, %s18, 1
        %s1460 = smul.addr %s1459, 8
        %s1461 = scalar_lea.vmem %s6, %s1460
      $region56: #{tpu_custom_call.1} parent=51 // pred_fallthru
        _
    $region52: #{tpu_custom_call.1} parent=5 // pred_fallthru
      _
  $region6: #{tpu_custom_call.1} parent=0 // loop_footer
    %s16 = sadd.s32 1, %s12
  $region7: #{tpu_custom_call.1} parent=0 // loop_footer_branch
    %11 = sbr.rel target = $region3
  $region8: #{tpu_custom_call.1} parent=0 // loop_exit
    _

</llo_original>
